<compile_context>
chip_gen: v7x
topology: tpu7x:2x2x1
jax: 0.10.0
libtpu: 0.0.40
codegen_flags: <defaults>
</compile_context>

<pallas_src>
import jax
import jax.numpy as jnp
from jax import lax
from jax.experimental import pallas as pl
from jax.experimental.pallas import tpu as pltpu

LANE = 128


def _round_up(x, m):
    return ((x + m - 1) // m) * m


# ----------------------------------------------------------------------------- kernel

def mlp_kernel(x_ref,
               w1_ref, b1_ref, w2_ref, b2_ref, w3_ref, b3_ref,
               w4_ref, b4_ref, w5_ref, b5_ref, w6r_ref, b6_ref,
               o_ref):
    """Fused forward for one (tb, Fp) batch tile; all weights resident in VMEM."""
    cdt = w1_ref.dtype                      # compute dtype (bf16 by default)
    h = x_ref[...].astype(cdt)              # in-kernel f32 -> bf16 cast (hidden under MXU)

    def layer(h, w_ref, b_ref):
        # MXU matmul with f32 accumulation; bias + ReLU in f32, cast back for next matmul.
        z = jnp.dot(h, w_ref[...], preferred_element_type=jnp.float32) + b_ref[...]
        return jnp.maximum(z, 0.0).astype(cdt)

    h = layer(h, w1_ref, b1_ref)            # (tb, 512)
    h = layer(h, w2_ref, b2_ref)            # (tb, 256)
    h = layer(h, w3_ref, b3_ref)            # (tb, 128)
    h = layer(h, w4_ref, b4_ref)            # (tb, 128)  (64 lane-padded, padding exactly 0)
    h = layer(h, w5_ref, b5_ref)            # (tb, 128)  (32 lane-padded, padding exactly 0)

    # Final 1-wide layer in transposed form so the per-row scalar lands lane-dense:
    #   (8, 128) . (tb, 128)^T -> (8, tb); only row 0 of w6r is real (rows 1..7 zero).
    zr = lax.dot_general(w6r_ref[...], h, (((1,), (1,)), ((), ())),
                         preferred_element_type=jnp.float32)
    row = zr[0:1, :] + b6_ref[...]          # (1, tb) + (1, 1) broadcast
    o_ref[...] = jax.nn.sigmoid(row).reshape(1, 1, row.shape[-1])


# ------------------------------------------------------------------- tile / VMEM policy

def _vmem_capacity_bytes():
    # Pure hardware query (cannot mask kernel compile errors); conservative
    # v7x-sized fallback if the query is unavailable on this runtime.
    try:
        return int(pltpu.get_tpu_info().vmem_capacity_bytes)
    except Exception:
        return 64 * 2**20


def _pick_tile_and_vmem(B, Fp, weight_bytes, compute_itemsize):
    budget = int(_vmem_capacity_bytes() * 0.75)          # headroom below physical VMEM

    def est(tb):
        io = 2 * tb * Fp * 4 + 2 * tb * 4                # double-buffered f32 in / packed out
        acts = tb * (Fp + 512 + 256) * (4 + compute_itemsize)   # generous live-intermediate bound
        return 2 * weight_bytes + io + acts

    tb = 2048                                            # amortize ~0.35us per-grid-step overhead
    while tb > 128 and est(tb) > budget:
        tb //= 2

    # Small batches: one tile covering the (16-row aligned, bf16 sublane-packed) batch.
    tb = min(tb, _round_up(max(B, 16), 16))
    tb = _round_up(tb, 16)

    # v7x has two TensorCores: give the "parallel" batch axis >= 2 tiles to shard
    # whenever the batch is large enough.
    while B >= 256 and _round_up(B, tb) // tb < 2 and tb > 128:
        tb = _round_up(tb // 2, 16)

    if est(tb) > budget:
        # TODO(synk): for very wide one-hot feature encodings, tile layer 1 over a
        # feature-chunk ("arbitrary") reduction grid axis instead of keeping all of
        # W1 resident in VMEM.
        raise ValueError(
            f"MLP weights + activations (~{est(tb) / 2**20:.1f} MiB) exceed the VMEM "
            f"budget ({budget / 2**20:.1f} MiB); feature width too large for the fused kernel.")

    n_tiles = _round_up(B, tb) // tb
    vmem_limit = int(min(max(est(tb), 32 * 2**20), budget))
    return tb, n_tiles, vmem_limit


# ----------------------------------------------------------------------- params / wrapper

def prepare_params(params, input_dim, compute_dtype=jnp.bfloat16):
    """Pad + cast the 6 (W, b) pairs ONCE (outside the per-call forward path).

    Returns (Fp, flat): Fp is the lane-padded feature width; flat is the tuple
    (W1,b1,...,W5,b5, W6row, b6) the kernel consumes. Zero padding is exact: padded
    feature columns hit zero weight rows; padded hidden columns come from zero weight
    columns / zero biases so they stay exactly 0 through the ReLUs.
    Pass compute_dtype=jnp.float32 if input features are not standardized and bf16
    layer-1 precision is a concern.
    """
    assert len(params) == 6
    out_pads = [512, 256, 128, 128, 128]     # lane-padded widths for layers 1..5
    Fp = _round_up(max(input_dim, LANE), LANE)
    flat = []
    in_p = Fp
    for li in range(5):
        w, b = params[li]
        in_d, out_d = w.shape
        out_p = out_pads[li]
        wp = jnp.zeros((in_p, out_p), compute_dtype).at[:in_d, :out_d].set(
            w.astype(compute_dtype))
        bp = jnp.zeros((1, out_p), jnp.float32).at[:, :out_d].set(b.astype(jnp.float32))
        flat += [wp, bp]
        in_p = out_p
    # Final 1-wide layer stored transposed: row 0 of an (8, 128) block holds W6[:, 0].
    w6, b6 = params[5]
    w6r = jnp.zeros((8, LANE), compute_dtype).at[0, :w6.shape[0]].set(
        w6[:, 0].astype(compute_dtype))
    b6p = jnp.asarray(b6, jnp.float32).reshape(1, 1)
    flat += [w6r, b6p]
    return Fp, tuple(flat)


def salary_predictor_forward(x, Fp, flat_params):
    """x: (B, F) float32.  flat_params: output of prepare_params.  Returns (B, 1) f32."""
    B, F = x.shape
    compute_itemsize = jnp.dtype(flat_params[0].dtype).itemsize
    weight_bytes = sum(int(a.size) * a.dtype.itemsize for a in flat_params)
    tb, n_tiles, vmem_limit = _pick_tile_and_vmem(B, Fp, weight_bytes, compute_itemsize)
    Bp = n_tiles * tb

    # Zero-pad the input in f32 (no separate cast pass) only when actually needed;
    # padded batch rows are sliced off below, padded feature cols hit zero weight rows.
    xp = x if (Bp == B and Fp == F) else jnp.pad(x, ((0, Bp - B), (0, Fp - F)))

    in_specs = [pl.BlockSpec((tb, Fp), lambda i: (i, 0))]
    # Weights/biases: full-array blocks with constant block index -> DMA'd once and
    # kept resident in VMEM across all grid steps.
    in_specs += [pl.BlockSpec(a.shape, lambda i: (0, 0)) for a in flat_params]
    # Lane-dense packed output: one (1, tb) f32 row per batch tile.
    out_specs = pl.BlockSpec((1, 1, tb), lambda i: (i, 0, 0))

    flops = 2 * Bp * (Fp * 512 + 512 * 256 + 256 * 128 + 128 * 128 + 128 * 128 + 128 * 8)
    cost = pl.CostEstimate(flops=flops, transcendentals=Bp,
                           bytes_accessed=Bp * Fp * 4 + weight_bytes + Bp * 4)

    out = pl.pallas_call(
        mlp_kernel,
        out_shape=jax.ShapeDtypeStruct((n_tiles, 1, tb), jnp.float32),
        grid_spec=pltpu.PrefetchScalarGridSpec(
            num_scalar_prefetch=0,
            grid=(n_tiles,),
            in_specs=in_specs,
            out_specs=out_specs,
        ),
        compiler_params=pltpu.CompilerParams(
            dimension_semantics=("parallel",),      # batch tiles independent (v7x 2 TCs)
            vmem_limit_bytes=vmem_limit,
        ),
        cost_estimate=cost,
    )(xp, *flat_params)

    return out.reshape(Bp)[:B].reshape(B, 1)


# -------------------------------------------------------------------------- reference

def init_params(key, input_dim):
    """Deterministic init matching the PyTorch module's layer shapes."""
    dims = [input_dim, 512, 256, 128, 64, 32, 1]
    params = []
    for i in range(len(dims) - 1):
        key, kw, kb = jax.random.split(key, 3)
        bound = 1.0 / (dims[i] ** 0.5)               # torch.nn.Linear default init range
        w = jax.random.uniform(kw, (dims[i], dims[i + 1]), jnp.float32, -bound, bound)
        b = jax.random.uniform(kb, (1, dims[i + 1]), jnp.float32, -bound, bound)
        params.append((w, b))
    return params


def reference_forward(x, params):
    h = x
    for li, (w, b) in enumerate(params):
        h = h @ w + b
        if li < len(params) - 1:
            h = jnp.maximum(h, 0.0)
    return jax.nn.sigmoid(h)


if __name__ == "__main__":
    key = jax.random.PRNGKey(0)
    k_x, k_p = jax.random.split(key)

    B, F = 16, 16   # F stands in for len(encoded_dataframe.columns) - 1
    x = jax.random.normal(k_x, (B, F), jnp.float32)
    params = init_params(k_p, F)
    Fp, flat = prepare_params(params, F)     # pad/cast once, outside the per-call path

    out = jax.block_until_ready(salary_predictor_forward(x, Fp, flat))
    ref = reference_forward(x, params)
    assert out.shape == (B, 1)
    # bf16 matmuls with f32 accumulation: loosened tolerance vs f32 reference.
    assert jnp.allclose(out, ref, atol=2e-2, rtol=0.0), float(jnp.max(jnp.abs(out - ref)))

    # Exercise the ragged-batch padding path.
    B2 = 13
    x2 = jax.random.normal(jax.random.PRNGKey(1), (B2, F), jnp.float32)
    out2 = jax.block_until_ready(salary_predictor_forward(x2, Fp, flat))
    ref2 = reference_forward(x2, params)
    assert out2.shape == (B2, 1)
    assert jnp.allclose(out2, ref2, atol=2e-2, rtol=0.0)

    print("KERNEL_OK")
</pallas_src>

<mosaic_0001>
module attributes {stable_mosaic.version = 11 : i64} {
  func.func @mlp_kernel(%arg0: i32, %arg1: memref<16x128xf32, #tpu.memory_space<vmem>>, %arg2: memref<128x512xbf16, #tpu.memory_space<vmem>>, %arg3: memref<1x512xf32, #tpu.memory_space<vmem>>, %arg4: memref<512x256xbf16, #tpu.memory_space<vmem>>, %arg5: memref<1x256xf32, #tpu.memory_space<vmem>>, %arg6: memref<256x128xbf16, #tpu.memory_space<vmem>>, %arg7: memref<1x128xf32, #tpu.memory_space<vmem>>, %arg8: memref<128x128xbf16, #tpu.memory_space<vmem>>, %arg9: memref<1x128xf32, #tpu.memory_space<vmem>>, %arg10: memref<128x128xbf16, #tpu.memory_space<vmem>>, %arg11: memref<1x128xf32, #tpu.memory_space<vmem>>, %arg12: memref<8x128xbf16, #tpu.memory_space<vmem>>, %arg13: memref<1x1xf32, #tpu.memory_space<vmem>>, %arg14: memref<1x1x16xf32, #tpu.memory_space<vmem>>) attributes {dimension_semantics = [#tpu.dimension_semantics<parallel>], iteration_bounds = array<i64: 1>, scalar_prefetch = 0 : i64, scratch_operands = 0 : i64, tpu.core_type = #tpu.core_type<tc>, window_params = [{transform_indices = @transform_0, window_bounds = array<i64: 16, 128>}, {pipeline_mode = #tpu.pipeline_mode<synchronous>, transform_indices = @transform_1, window_bounds = array<i64: 128, 512>}, {pipeline_mode = #tpu.pipeline_mode<synchronous>, transform_indices = @transform_2, window_bounds = array<i64: 1, 512>}, {pipeline_mode = #tpu.pipeline_mode<synchronous>, transform_indices = @transform_3, window_bounds = array<i64: 512, 256>}, {pipeline_mode = #tpu.pipeline_mode<synchronous>, transform_indices = @transform_4, window_bounds = array<i64: 1, 256>}, {pipeline_mode = #tpu.pipeline_mode<synchronous>, transform_indices = @transform_5, window_bounds = array<i64: 256, 128>}, {pipeline_mode = #tpu.pipeline_mode<synchronous>, transform_indices = @transform_6, window_bounds = array<i64: 1, 128>}, {pipeline_mode = #tpu.pipeline_mode<synchronous>, transform_indices = @transform_7, window_bounds = array<i64: 128, 128>}, {pipeline_mode = #tpu.pipeline_mode<synchronous>, transform_indices = @transform_8, window_bounds = array<i64: 1, 128>}, {pipeline_mode = #tpu.pipeline_mode<synchronous>, transform_indices = @transform_9, window_bounds = array<i64: 128, 128>}, {pipeline_mode = #tpu.pipeline_mode<synchronous>, transform_indices = @transform_10, window_bounds = array<i64: 1, 128>}, {pipeline_mode = #tpu.pipeline_mode<synchronous>, transform_indices = @transform_11, window_bounds = array<i64: 8, 128>}, {pipeline_mode = #tpu.pipeline_mode<synchronous>, transform_indices = @transform_12, window_bounds = array<i64: 1, 1>}, {transform_indices = @transform_13, window_bounds = array<i64: 1, 1, 16>}]} {
    %c0 = arith.constant 0 : index
    %c0_0 = arith.constant 0 : index
    %0 = vector.load %arg1[%c0, %c0_0] : memref<16x128xf32, #tpu.memory_space<vmem>>, vector<16x128xf32>
    %1 = arith.truncf %0 : vector<16x128xf32> to vector<16x128xbf16>
    %c0_1 = arith.constant 0 : index
    %c0_2 = arith.constant 0 : index
    %2 = vector.load %arg2[%c0_1, %c0_2] : memref<128x512xbf16, #tpu.memory_space<vmem>>, vector<128x512xbf16>
    %cst = arith.constant dense<0.000000e+00> : vector<16x512xf32>
    %3 = tpu.matmul %1, %2, %cst {dimension_numbers = #tpu.dot_dimension_numbers<[1], [0], [0], [1], [0, 0, 1, 1], [], []>} : vector<16x128xbf16>, vector<128x512xbf16>, vector<16x512xf32> -> vector<16x512xf32>
    %c0_3 = arith.constant 0 : index
    %c0_4 = arith.constant 0 : index
    %4 = vector.load %arg3[%c0_3, %c0_4] : memref<1x512xf32, #tpu.memory_space<vmem>>, vector<1x512xf32>
    %5 = vector.broadcast %4 : vector<1x512xf32> to vector<16x512xf32>
    %6 = arith.addf %3, %5 : vector<16x512xf32>
    %cst_5 = arith.constant 0.000000e+00 : f32
    %7 = vector.broadcast %cst_5 : f32 to vector<16x512xf32>
    %8 = arith.maximumf %6, %7 : vector<16x512xf32>
    %9 = arith.truncf %8 : vector<16x512xf32> to vector<16x512xbf16>
    %c0_6 = arith.constant 0 : index
    %c0_7 = arith.constant 0 : index
    %10 = vector.load %arg4[%c0_6, %c0_7] : memref<512x256xbf16, #tpu.memory_space<vmem>>, vector<512x256xbf16>
    %cst_8 = arith.constant dense<0.000000e+00> : vector<16x256xf32>
    %11 = tpu.matmul %9, %10, %cst_8 {dimension_numbers = #tpu.dot_dimension_numbers<[1], [0], [0], [1], [0, 0, 1, 1], [], []>} : vector<16x512xbf16>, vector<512x256xbf16>, vector<16x256xf32> -> vector<16x256xf32>
    %c0_9 = arith.constant 0 : index
    %c0_10 = arith.constant 0 : index
    %12 = vector.load %arg5[%c0_9, %c0_10] : memref<1x256xf32, #tpu.memory_space<vmem>>, vector<1x256xf32>
    %13 = vector.broadcast %12 : vector<1x256xf32> to vector<16x256xf32>
    %14 = arith.addf %11, %13 : vector<16x256xf32>
    %cst_11 = arith.constant 0.000000e+00 : f32
    %15 = vector.broadcast %cst_11 : f32 to vector<16x256xf32>
    %16 = arith.maximumf %14, %15 : vector<16x256xf32>
    %17 = arith.truncf %16 : vector<16x256xf32> to vector<16x256xbf16>
    %c0_12 = arith.constant 0 : index
    %c0_13 = arith.constant 0 : index
    %18 = vector.load %arg6[%c0_12, %c0_13] : memref<256x128xbf16, #tpu.memory_space<vmem>>, vector<256x128xbf16>
    %cst_14 = arith.constant dense<0.000000e+00> : vector<16x128xf32>
    %19 = tpu.matmul %17, %18, %cst_14 {dimension_numbers = #tpu.dot_dimension_numbers<[1], [0], [0], [1], [0, 0, 1, 1], [], []>} : vector<16x256xbf16>, vector<256x128xbf16>, vector<16x128xf32> -> vector<16x128xf32>
    %c0_15 = arith.constant 0 : index
    %c0_16 = arith.constant 0 : index
    %20 = vector.load %arg7[%c0_15, %c0_16] : memref<1x128xf32, #tpu.memory_space<vmem>>, vector<1x128xf32>
    %21 = vector.broadcast %20 : vector<1x128xf32> to vector<16x128xf32>
    %22 = arith.addf %19, %21 : vector<16x128xf32>
    %cst_17 = arith.constant 0.000000e+00 : f32
    %23 = vector.broadcast %cst_17 : f32 to vector<16x128xf32>
    %24 = arith.maximumf %22, %23 : vector<16x128xf32>
    %25 = arith.truncf %24 : vector<16x128xf32> to vector<16x128xbf16>
    %c0_18 = arith.constant 0 : index
    %c0_19 = arith.constant 0 : index
    %26 = vector.load %arg8[%c0_18, %c0_19] : memref<128x128xbf16, #tpu.memory_space<vmem>>, vector<128x128xbf16>
    %cst_20 = arith.constant dense<0.000000e+00> : vector<16x128xf32>
    %27 = tpu.matmul %25, %26, %cst_20 {dimension_numbers = #tpu.dot_dimension_numbers<[1], [0], [0], [1], [0, 0, 1, 1], [], []>} : vector<16x128xbf16>, vector<128x128xbf16>, vector<16x128xf32> -> vector<16x128xf32>
    %c0_21 = arith.constant 0 : index
    %c0_22 = arith.constant 0 : index
    %28 = vector.load %arg9[%c0_21, %c0_22] : memref<1x128xf32, #tpu.memory_space<vmem>>, vector<1x128xf32>
    %29 = vector.broadcast %28 : vector<1x128xf32> to vector<16x128xf32>
    %30 = arith.addf %27, %29 : vector<16x128xf32>
    %cst_23 = arith.constant 0.000000e+00 : f32
    %31 = vector.broadcast %cst_23 : f32 to vector<16x128xf32>
    %32 = arith.maximumf %30, %31 : vector<16x128xf32>
    %33 = arith.truncf %32 : vector<16x128xf32> to vector<16x128xbf16>
    %c0_24 = arith.constant 0 : index
    %c0_25 = arith.constant 0 : index
    %34 = vector.load %arg10[%c0_24, %c0_25] : memref<128x128xbf16, #tpu.memory_space<vmem>>, vector<128x128xbf16>
    %cst_26 = arith.constant dense<0.000000e+00> : vector<16x128xf32>
    %35 = tpu.matmul %33, %34, %cst_26 {dimension_numbers = #tpu.dot_dimension_numbers<[1], [0], [0], [1], [0, 0, 1, 1], [], []>} : vector<16x128xbf16>, vector<128x128xbf16>, vector<16x128xf32> -> vector<16x128xf32>
    %c0_27 = arith.constant 0 : index
    %c0_28 = arith.constant 0 : index
    %36 = vector.load %arg11[%c0_27, %c0_28] : memref<1x128xf32, #tpu.memory_space<vmem>>, vector<1x128xf32>
    %37 = vector.broadcast %36 : vector<1x128xf32> to vector<16x128xf32>
    %38 = arith.addf %35, %37 : vector<16x128xf32>
    %cst_29 = arith.constant 0.000000e+00 : f32
    %39 = vector.broadcast %cst_29 : f32 to vector<16x128xf32>
    %40 = arith.maximumf %38, %39 : vector<16x128xf32>
    %41 = arith.truncf %40 : vector<16x128xf32> to vector<16x128xbf16>
    %c0_30 = arith.constant 0 : index
    %c0_31 = arith.constant 0 : index
    %42 = vector.load %arg12[%c0_30, %c0_31] : memref<8x128xbf16, #tpu.memory_space<vmem>>, vector<8x128xbf16>
    %cst_32 = arith.constant dense<0.000000e+00> : vector<8x16xf32>
    %43 = tpu.matmul %42, %41, %cst_32 {dimension_numbers = #tpu.dot_dimension_numbers<[1], [1], [0], [0], [0, 0, 1, 0], [], []>} : vector<8x128xbf16>, vector<16x128xbf16>, vector<8x16xf32> -> vector<8x16xf32>
    %44 = vector.extract_strided_slice %43 {offsets = [0, 0], sizes = [1, 16], strides = [1, 1]} : vector<8x16xf32> to vector<1x16xf32>
    %c0_33 = arith.constant 0 : index
    %c0_34 = arith.constant 0 : index
    %45 = vector.load %arg13[%c0_33, %c0_34] : memref<1x1xf32, #tpu.memory_space<vmem>>, vector<1x1xf32>
    %46 = vector.broadcast %45 : vector<1x1xf32> to vector<1x16xf32>
    %47 = arith.addf %44, %46 : vector<1x16xf32>
    %48 = arith.negf %47 : vector<1x16xf32>
    %49 = math.exp %48 : vector<1x16xf32>
    %cst_35 = arith.constant 1.000000e+00 : f32
    %50 = vector.broadcast %cst_35 : f32 to vector<1x16xf32>
    %51 = arith.addf %50, %49 : vector<1x16xf32>
    %52 = arith.divf %50, %51 : vector<1x16xf32>
    %53 = vector.shape_cast %52 : vector<1x16xf32> to vector<1x1x16xf32>
    %c0_36 = arith.constant 0 : index
    %c0_37 = arith.constant 0 : index
    %c0_38 = arith.constant 0 : index
    %54 = vector.load %arg14[%c0_36, %c0_37, %c0_38] : memref<1x1x16xf32, #tpu.memory_space<vmem>>, vector<1x1x16xf32>
    tpu.vector_store %arg14[%c0_36, %c0_37, %c0_38], %53 {strides = array<i32>} : memref<1x1x16xf32, #tpu.memory_space<vmem>>, vector<1x1x16xf32>,
    return
  }
  func.func @transform_0(%arg0: i32) -> (i32, i32) {
    %c0_i32 = arith.constant 0 : i32
    %c0_i32_0 = arith.constant 0 : i32
    return %arg0, %c0_i32 : i32, i32
  }
  func.func @transform_1(%arg0: i32) -> (i32, i32) {
    %c0_i32 = arith.constant 0 : i32
    %c0_i32_0 = arith.constant 0 : i32
    %c0_i32_1 = arith.constant 0 : i32
    return %c0_i32, %c0_i32_0 : i32, i32
  }
  func.func @transform_2(%arg0: i32) -> (i32, i32) {
    %c0_i32 = arith.constant 0 : i32
    %c0_i32_0 = arith.constant 0 : i32
    %c0_i32_1 = arith.constant 0 : i32
    return %c0_i32, %c0_i32_0 : i32, i32
  }
  func.func @transform_3(%arg0: i32) -> (i32, i32) {
    %c0_i32 = arith.constant 0 : i32
    %c0_i32_0 = arith.constant 0 : i32
    %c0_i32_1 = arith.constant 0 : i32
    return %c0_i32, %c0_i32_0 : i32, i32
  }
  func.func @transform_4(%arg0: i32) -> (i32, i32) {
    %c0_i32 = arith.constant 0 : i32
    %c0_i32_0 = arith.constant 0 : i32
    %c0_i32_1 = arith.constant 0 : i32
    return %c0_i32, %c0_i32_0 : i32, i32
  }
  func.func @transform_5(%arg0: i32) -> (i32, i32) {
    %c0_i32 = arith.constant 0 : i32
    %c0_i32_0 = arith.constant 0 : i32
    %c0_i32_1 = arith.constant 0 : i32
    return %c0_i32, %c0_i32_0 : i32, i32
  }
  func.func @transform_6(%arg0: i32) -> (i32, i32) {
    %c0_i32 = arith.constant 0 : i32
    %c0_i32_0 = arith.constant 0 : i32
    %c0_i32_1 = arith.constant 0 : i32
    return %c0_i32, %c0_i32_0 : i32, i32
  }
  func.func @transform_7(%arg0: i32) -> (i32, i32) {
    %c0_i32 = arith.constant 0 : i32
    %c0_i32_0 = arith.constant 0 : i32
    %c0_i32_1 = arith.constant 0 : i32
    return %c0_i32, %c0_i32_0 : i32, i32
  }
  func.func @transform_8(%arg0: i32) -> (i32, i32) {
    %c0_i32 = arith.constant 0 : i32
    %c0_i32_0 = arith.constant 0 : i32
    %c0_i32_1 = arith.constant 0 : i32
    return %c0_i32, %c0_i32_0 : i32, i32
  }
  func.func @transform_9(%arg0: i32) -> (i32, i32) {
    %c0_i32 = arith.constant 0 : i32
    %c0_i32_0 = arith.constant 0 : i32
    %c0_i32_1 = arith.constant 0 : i32
    return %c0_i32, %c0_i32_0 : i32, i32
  }
  func.func @transform_10(%arg0: i32) -> (i32, i32) {
    %c0_i32 = arith.constant 0 : i32
    %c0_i32_0 = arith.constant 0 : i32
    %c0_i32_1 = arith.constant 0 : i32
    return %c0_i32, %c0_i32_0 : i32, i32
  }
  func.func @transform_11(%arg0: i32) -> (i32, i32) {
    %c0_i32 = arith.constant 0 : i32
    %c0_i32_0 = arith.constant 0 : i32
    %c0_i32_1 = arith.constant 0 : i32
    return %c0_i32, %c0_i32_0 : i32, i32
  }
  func.func @transform_12(%arg0: i32) -> (i32, i32) {
    %c0_i32 = arith.constant 0 : i32
    %c0_i32_0 = arith.constant 0 : i32
    %c0_i32_1 = arith.constant 0 : i32
    return %c0_i32, %c0_i32_0 : i32, i32
  }
  func.func @transform_13(%arg0: i32) -> (i32, i32, i32) {
    %c0_i32 = arith.constant 0 : i32
    %c0_i32_0 = arith.constant 0 : i32
    %c0_i32_1 = arith.constant 0 : i32
    return %arg0, %c0_i32, %c0_i32_0 : i32, i32, i32
  }
}

</mosaic_0001>

<llo_original>
// kernel: tpu_custom_call.1
$region0: #{tpu_custom_call.1}
  #allocation0 [shape = 'u32[]', space=smem, size = 0x4, offset = 0x4, fixed_abs, tag = 'smem constant byte address 0x4 - core index']
  #allocation1 [shape = 'u32[144,128]{1,0:T(1,128)}', space=vmem, size = 0x12000, scoped, tag = 'internal scratch']
  #allocation2 [shape = 'f32[1,1]{1,0:T(1,128)S(1)}', space=vmem, size = 0x200, scoped, tag = 'scoped memory for tpu_custom_call.1']
  %s0 = inlined_call_operand.hbm [shape: f32[16,128], index: 0, kind: input, shape index: {}]
  %s1 = inlined_call_operand.hbm [shape: bf16[128,512], index: 1, kind: input, shape index: {}]
  %s2 = inlined_call_operand.vmem [shape: f32[1,512], index: 2, kind: input, shape index: {}]
  %s3 = inlined_call_operand.hbm [shape: bf16[512,256], index: 3, kind: input, shape index: {}]
  %s4 = inlined_call_operand.vmem [shape: f32[1,256], index: 4, kind: input, shape index: {}]
  %s5 = inlined_call_operand.hbm [shape: bf16[256,128], index: 5, kind: input, shape index: {}]
  %s6 = inlined_call_operand.vmem [shape: f32[1,128], index: 6, kind: input, shape index: {}]
  %s7 = inlined_call_operand.hbm [shape: bf16[128,128], index: 7, kind: input, shape index: {}]
  %s8 = inlined_call_operand.vmem [shape: f32[1,128], index: 8, kind: input, shape index: {}]
  %s9 = inlined_call_operand.hbm [shape: bf16[128,128], index: 9, kind: input, shape index: {}]
  %s10 = inlined_call_operand.vmem [shape: f32[1,128], index: 10, kind: input, shape index: {}]
  %s11 = inlined_call_operand.vmem [shape: bf16[8,128], index: 11, kind: input, shape index: {}]
  %s12 = inlined_call_operand.<no memory space> [shape: f32[1,1], index: 12, kind: input, shape index: {}]
  %s13 = inlined_call_operand.hbm [shape: f32[1,1,16], index: 13, kind: output, shape index: {}]
  %s14 = sld [smem:[#allocation0]]
  $region86: #{tpu_custom_call.1} parent=0
    _
  %s16 = ssub.s32 1, %s14
  %s17 = scalar_select 0, %s16, %s14
  %v18 = vstv %s12
  %19 = vst [vmem:[#allocation2] sm:$0x1] %v18
  $region1: #{tpu_custom_call.1} parent=0
    #allocation3 [shape = 'u8[8192]{0}', space=vmem, size = 0x2000, scoped, tag = 'input window, operand 0, single buffered']
    #allocation4 [shape = 's32[1]{0}', space=sflag, size = 0x4, scoped, tag = 'scoped memory for tpu_custom_call.1']
    #allocation5 [shape = 's32[1]{0}', space=sflag, size = 0x4, scoped, tag = 'scoped memory for tpu_custom_call.1']
    #allocation6 [shape = 'u8[131072]{0}', space=vmem, size = 0x20000, scoped, tag = 'input window, operand 1, single buffered']
    #allocation7 [shape = 's32[1]{0}', space=sflag, size = 0x4, scoped, tag = 'scoped memory for tpu_custom_call.1']
    #allocation8 [shape = 'u8[262144]{0}', space=vmem, size = 0x40000, scoped, tag = 'input window, operand 3, single buffered']
    #allocation9 [shape = 'u8[65536]{0}', space=vmem, size = 0x10000, scoped, tag = 'input window, operand 5, single buffered']
    #allocation10 [shape = 's32[1]{0}', space=sflag, size = 0x4, scoped, tag = 'scoped memory for tpu_custom_call.1']
    #allocation11 [shape = 'u8[32768]{0}', space=vmem, size = 0x8000, scoped, tag = 'input window, operand 7, single buffered']
    #allocation12 [shape = 'u8[32768]{0}', space=vmem, size = 0x8000, scoped, tag = 'input window, operand 9, single buffered']
    #allocation13 [shape = 's32[1]{0}', space=sflag, size = 0x4, scoped, tag = 'scoped memory for tpu_custom_call.1']
    #allocation14 [shape = 'u8[512]{0}', space=vmem, size = 0x400, scoped, tag = 'output window, operand 0, single buffered']
    %20 = vsyncpa [#allocation4], 0
    %21 = vsyncpa [#allocation7], 0
    %22 = vsyncpa [#allocation10], 0
    %23 = vsyncpa [#allocation13], 0
    %24 = vsyncpa [#allocation5], 0
    // Predicated region
    $region2: #{tpu_custom_call.1} parent=1 // pred_check
      _
    $region3: #{tpu_custom_call.1} parent=1 // pred_check_branch
      %26 = sbr.rel (0) target = $region5
    $region4: #{tpu_custom_call.1} parent=1 // pred_region
      %s28 = ssub.s32 256, 256
      %29 = vsyncadd [#allocation4], %s28
      %s30 = sshll.u32 [#allocation3], 4
      %s31 = int_to_ptr.vmem [resolvable:$true] %s30
      %36 = dma.hbm_to_vmem [thread:$0]  %s0, 256, %s31, [#allocation4], 128, 128, 8
    $region5: #{tpu_custom_call.1} parent=1 // pred_fallthru
      _
    // Predicated region
    $region6: #{tpu_custom_call.1} parent=1 // pred_check
      _
    $region7: #{tpu_custom_call.1} parent=1 // pred_check_branch
      %38 = sbr.rel (0) target = $region9
    $region8: #{tpu_custom_call.1} parent=1 // pred_region
      %s40 = ssub.s32 4096, 4096
      %41 = vsyncadd [#allocation7], %s40
      %s42 = sshll.u32 [#allocation6], 4
      %s43 = int_to_ptr.vmem [resolvable:$true] %s42
      %48 = dma.hbm_to_vmem [thread:$0]  %s1, 4096, %s43, [#allocation7], 256, 256, 16
    $region9: #{tpu_custom_call.1} parent=1 // pred_fallthru
      _
    // Predicated region
    $region10: #{tpu_custom_call.1} parent=1 // pred_check
      _
    $region11: #{tpu_custom_call.1} parent=1 // pred_check_branch
      %50 = sbr.rel (0) target = $region13
    $region12: #{tpu_custom_call.1} parent=1 // pred_region
      _
    $region13: #{tpu_custom_call.1} parent=1 // pred_fallthru
      _
    // Predicated region
    $region14: #{tpu_custom_call.1} parent=1 // pred_check
      _
    $region15: #{tpu_custom_call.1} parent=1 // pred_check_branch
      %52 = sbr.rel (0) target = $region17
    $region16: #{tpu_custom_call.1} parent=1 // pred_region
      %s54 = ssub.s32 8192, 8192
      %55 = vsyncadd [#allocation7], %s54
      %s56 = sshll.u32 [#allocation8], 4
      %s57 = int_to_ptr.vmem [resolvable:$true] %s56
      %62 = dma.hbm_to_vmem [thread:$0]  %s3, 8192, %s57, [#allocation7], 128, 128, 8
    $region17: #{tpu_custom_call.1} parent=1 // pred_fallthru
      _
    // Predicated region
    $region18: #{tpu_custom_call.1} parent=1 // pred_check
      _
    $region19: #{tpu_custom_call.1} parent=1 // pred_check_branch
      %64 = sbr.rel (0) target = $region21
    $region20: #{tpu_custom_call.1} parent=1 // pred_region
      _
    $region21: #{tpu_custom_call.1} parent=1 // pred_fallthru
      _
    // Predicated region
    $region22: #{tpu_custom_call.1} parent=1 // pred_check
      _
    $region23: #{tpu_custom_call.1} parent=1 // pred_check_branch
      %66 = sbr.rel (0) target = $region25
    $region24: #{tpu_custom_call.1} parent=1 // pred_region
      %s68 = ssub.s32 2048, 2048
      %69 = vsyncadd [#allocation10], %s68
      %s70 = sshll.u32 [#allocation9], 4
      %s71 = int_to_ptr.vmem [resolvable:$true] %s70
      %76 = dma.hbm_to_vmem [thread:$0]  %s5, 2048, %s71, [#allocation10], 64, 64, 4
    $region25: #{tpu_custom_call.1} parent=1 // pred_fallthru
      _
    // Predicated region
    $region26: #{tpu_custom_call.1} parent=1 // pred_check
      _
    $region27: #{tpu_custom_call.1} parent=1 // pred_check_branch
      %78 = sbr.rel (0) target = $region29
    $region28: #{tpu_custom_call.1} parent=1 // pred_region
      _
    $region29: #{tpu_custom_call.1} parent=1 // pred_fallthru
      _
    // Predicated region
    $region30: #{tpu_custom_call.1} parent=1 // pred_check
      _
    $region31: #{tpu_custom_call.1} parent=1 // pred_check_branch
      %80 = sbr.rel (0) target = $region33
    $region32: #{tpu_custom_call.1} parent=1 // pred_region
      %s82 = ssub.s32 1024, 1024
      %83 = vsyncadd [#allocation10], %s82
      %s84 = sshll.u32 [#allocation11], 4
      %s85 = int_to_ptr.vmem [resolvable:$true] %s84
      %90 = dma.hbm_to_vmem [thread:$0]  %s7, 1024, %s85, [#allocation10], 64, 64, 4
    $region33: #{tpu_custom_call.1} parent=1 // pred_fallthru
      _
    // Predicated region
    $region34: #{tpu_custom_call.1} parent=1 // pred_check
      _
    $region35: #{tpu_custom_call.1} parent=1 // pred_check_branch
      %92 = sbr.rel (0) target = $region37
    $region36: #{tpu_custom_call.1} parent=1 // pred_region
      _
    $region37: #{tpu_custom_call.1} parent=1 // pred_fallthru
      _
    // Predicated region
    $region38: #{tpu_custom_call.1} parent=1 // pred_check
      _
    $region39: #{tpu_custom_call.1} parent=1 // pred_check_branch
      %94 = sbr.rel (0) target = $region41
    $region40: #{tpu_custom_call.1} parent=1 // pred_region
      %s96 = ssub.s32 1024, 1024
      %97 = vsyncadd [#allocation13], %s96
      %s98 = sshll.u32 [#allocation12], 4
      %s99 = int_to_ptr.vmem [resolvable:$true] %s98
      %104 = dma.hbm_to_vmem [thread:$0]  %s9, 1024, %s99, [#allocation13], 64, 64, 4
    $region41: #{tpu_custom_call.1} parent=1 // pred_fallthru
      _
    // Predicated region
    $region42: #{tpu_custom_call.1} parent=1 // pred_check
      _
    $region43: #{tpu_custom_call.1} parent=1 // pred_check_branch
      %106 = sbr.rel (0) target = $region45
    $region44: #{tpu_custom_call.1} parent=1 // pred_region
      _
    $region45: #{tpu_custom_call.1} parent=1 // pred_fallthru
      _
    // Predicated region
    $region46: #{tpu_custom_call.1} parent=1 // pred_check
      _
    $region47: #{tpu_custom_call.1} parent=1 // pred_check_branch
      %108 = sbr.rel (0) target = $region49
    $region48: #{tpu_custom_call.1} parent=1 // pred_region
      _
    $region49: #{tpu_custom_call.1} parent=1 // pred_fallthru
      _
    // Predicated region
    $region50: #{tpu_custom_call.1} parent=1 // pred_check
      _
    $region51: #{tpu_custom_call.1} parent=1 // pred_check_branch
      %110 = sbr.rel (0) target = $region53
    $region52: #{tpu_custom_call.1} parent=1 // pred_region
      _
    $region53: #{tpu_custom_call.1} parent=1 // pred_fallthru
      _
    // Predicated region
    $region54: #{tpu_custom_call.1} parent=1 // pred_check
      _
    $region55: #{tpu_custom_call.1} parent=1 // pred_check_branch
      %112 = sbr.rel (0) target = $region57
    $region56: #{tpu_custom_call.1} parent=1 // pred_region
      %113 = dma.done [#allocation4], 256
    $region57: #{tpu_custom_call.1} parent=1 // pred_fallthru
      _
    // Predicated region
    $region58: #{tpu_custom_call.1} parent=1 // pred_check
      _
    $region59: #{tpu_custom_call.1} parent=1 // pred_check_branch
      %115 = sbr.rel (0) target = $region61
    $region60: #{tpu_custom_call.1} parent=1 // pred_region
      %116 = dma.done [#allocation7], 4096
    $region61: #{tpu_custom_call.1} parent=1 // pred_fallthru
      _
    // Predicated region
    $region62: #{tpu_custom_call.1} parent=1 // pred_check
      _
    $region63: #{tpu_custom_call.1} parent=1 // pred_check_branch
      %118 = sbr.rel (0) target = $region65
    $region64: #{tpu_custom_call.1} parent=1 // pred_region
      %119 = dma.done [#allocation7], 8192
    $region65: #{tpu_custom_call.1} parent=1 // pred_fallthru
      _
    // Predicated region
    $region66: #{tpu_custom_call.1} parent=1 // pred_check
      _
    $region67: #{tpu_custom_call.1} parent=1 // pred_check_branch
      %121 = sbr.rel (0) target = $region69
    $region68: #{tpu_custom_call.1} parent=1 // pred_region
      %122 = dma.done [#allocation10], 2048
    $region69: #{tpu_custom_call.1} parent=1 // pred_fallthru
      _
    // Predicated region
    $region70: #{tpu_custom_call.1} parent=1 // pred_check
      _
    $region71: #{tpu_custom_call.1} parent=1 // pred_check_branch
      %124 = sbr.rel (0) target = $region73
    $region72: #{tpu_custom_call.1} parent=1 // pred_region
      %125 = dma.done [#allocation10], 1024
    $region73: #{tpu_custom_call.1} parent=1 // pred_fallthru
      _
    // Predicated region
    $region74: #{tpu_custom_call.1} parent=1 // pred_check
      _
    $region75: #{tpu_custom_call.1} parent=1 // pred_check_branch
      %127 = sbr.rel (0) target = $region77
    $region76: #{tpu_custom_call.1} parent=1 // pred_region
      %128 = dma.done [#allocation13], 1024
    $region77: #{tpu_custom_call.1} parent=1 // pred_fallthru
      _
    %v130 = vld [vmem:[#allocation3] sm:$0xff]
    %v131 = vld [vmem:[#allocation3 + $0x8] sm:$0xff]
    %v132 = vpack.c.bf16 %v131, %v130
    %v133 = vld [vmem:[#allocation6] sm:$0xff]
    %v134 = vld [vmem:[#allocation6 + $0x8] sm:$0xff]
    %v135 = vld [vmem:[#allocation6 + $0x10] sm:$0xff]
    %v136 = vld [vmem:[#allocation6 + $0x18] sm:$0xff]
    %v137 = vld [vmem:[#allocation6 + $0x20] sm:$0xff]
    %v138 = vld [vmem:[#allocation6 + $0x28] sm:$0xff]
    %v139 = vld [vmem:[#allocation6 + $0x30] sm:$0xff]
    %v140 = vld [vmem:[#allocation6 + $0x38] sm:$0xff]
    %v141 = vld [vmem:[#allocation6 + $0x40] sm:$0xff]
    %v142 = vld [vmem:[#allocation6 + $0x48] sm:$0xff]
    %v143 = vld [vmem:[#allocation6 + $0x50] sm:$0xff]
    %v144 = vld [vmem:[#allocation6 + $0x58] sm:$0xff]
    %v145 = vld [vmem:[#allocation6 + $0x60] sm:$0xff]
    %v146 = vld [vmem:[#allocation6 + $0x68] sm:$0xff]
    %v147 = vld [vmem:[#allocation6 + $0x70] sm:$0xff]
    %v148 = vld [vmem:[#allocation6 + $0x78] sm:$0xff]
    %v149 = vld [vmem:[#allocation6 + $0x80] sm:$0xff]
    %v150 = vld [vmem:[#allocation6 + $0x88] sm:$0xff]
    %v151 = vld [vmem:[#allocation6 + $0x90] sm:$0xff]
    %v152 = vld [vmem:[#allocation6 + $0x98] sm:$0xff]
    %v153 = vld [vmem:[#allocation6 + $0xa0] sm:$0xff]
    %v154 = vld [vmem:[#allocation6 + $0xa8] sm:$0xff]
    %v155 = vld [vmem:[#allocation6 + $0xb0] sm:$0xff]
    %v156 = vld [vmem:[#allocation6 + $0xb8] sm:$0xff]
    %v157 = vld [vmem:[#allocation6 + $0xc0] sm:$0xff]
    %v158 = vld [vmem:[#allocation6 + $0xc8] sm:$0xff]
    %v159 = vld [vmem:[#allocation6 + $0xd0] sm:$0xff]
    %v160 = vld [vmem:[#allocation6 + $0xd8] sm:$0xff]
    %v161 = vld [vmem:[#allocation6 + $0xe0] sm:$0xff]
    %v162 = vld [vmem:[#allocation6 + $0xe8] sm:$0xff]
    %v163 = vld [vmem:[#allocation6 + $0xf0] sm:$0xff]
    %v164 = vld [vmem:[#allocation6 + $0xf8] sm:$0xff]
    %v165 = vld [vmem:[%s2] sm:$0xf]
    %v167 = vlaneseq
    %v168 = vshrl.u32 %v167, 7
    %v169 = vsub.s32 0, %v168
    %v170 = vrot.slane %v165, %v169
    %v171 = vlaneseq
    %v172 = vshrl.u32 %v171, 7
    %v173 = vsub.s32 1, %v172
    %v174 = vrot.slane %v165, %v173
    %v175 = vlaneseq
    %v176 = vshrl.u32 %v175, 7
    %v177 = vsub.s32 2, %v176
    %v178 = vrot.slane %v165, %v177
    %v179 = vlaneseq
    %v180 = vshrl.u32 %v179, 7
    %v181 = vsub.s32 3, %v180
    %v182 = vrot.slane %v165, %v181
    %v219 = vunpack.c.l.b16 %v133
    %v220 = vunpack.c.h.b16 %v133
    %v221 = vunpack.c.l.b16 %v134
    %v222 = vunpack.c.h.b16 %v134
    %v223 = vunpack.c.l.b16 %v135
    %v224 = vunpack.c.h.b16 %v135
    %v225 = vunpack.c.l.b16 %v136
    %v226 = vunpack.c.h.b16 %v136
    %v227 = vunpack.c.l.b16 %v137
    %v228 = vunpack.c.h.b16 %v137
    %v229 = vunpack.c.l.b16 %v138
    %v230 = vunpack.c.h.b16 %v138
    %v231 = vunpack.c.l.b16 %v139
    %v232 = vunpack.c.h.b16 %v139
    %v233 = vunpack.c.l.b16 %v140
    %v234 = vunpack.c.h.b16 %v140
    %v235 = vunpack.c.l.b16 %v141
    %v236 = vunpack.c.h.b16 %v141
    %v237 = vunpack.c.l.b16 %v142
    %v238 = vunpack.c.h.b16 %v142
    %v239 = vunpack.c.l.b16 %v143
    %v240 = vunpack.c.h.b16 %v143
    %v241 = vunpack.c.l.b16 %v144
    %v242 = vunpack.c.h.b16 %v144
    %v243 = vunpack.c.l.b16 %v145
    %v244 = vunpack.c.h.b16 %v145
    %v245 = vunpack.c.l.b16 %v146
    %v246 = vunpack.c.h.b16 %v146
    %v247 = vunpack.c.l.b16 %v147
    %v248 = vunpack.c.h.b16 %v147
    %v249 = vunpack.c.l.b16 %v148
    %v250 = vunpack.c.h.b16 %v148
    %v251 = vunpack.c.l.b16 %v149
    %v252 = vunpack.c.h.b16 %v149
    %v253 = vunpack.c.l.b16 %v150
    %v254 = vunpack.c.h.b16 %v150
    %v255 = vunpack.c.l.b16 %v151
    %v256 = vunpack.c.h.b16 %v151
    %v257 = vunpack.c.l.b16 %v152
    %v258 = vunpack.c.h.b16 %v152
    %v259 = vunpack.c.l.b16 %v153
    %v260 = vunpack.c.h.b16 %v153
    %v261 = vunpack.c.l.b16 %v154
    %v262 = vunpack.c.h.b16 %v154
    %v263 = vunpack.c.l.b16 %v155
    %v264 = vunpack.c.h.b16 %v155
    %v265 = vunpack.c.l.b16 %v156
    %v266 = vunpack.c.h.b16 %v156
    %v267 = vunpack.c.l.b16 %v157
    %v268 = vunpack.c.h.b16 %v157
    %v269 = vunpack.c.l.b16 %v158
    %v270 = vunpack.c.h.b16 %v158
    %v271 = vunpack.c.l.b16 %v159
    %v272 = vunpack.c.h.b16 %v159
    %v273 = vunpack.c.l.b16 %v160
    %v274 = vunpack.c.h.b16 %v160
    %v275 = vunpack.c.l.b16 %v161
    %v276 = vunpack.c.h.b16 %v161
    %v277 = vunpack.c.l.b16 %v162
    %v278 = vunpack.c.h.b16 %v162
    %v279 = vunpack.c.l.b16 %v163
    %v280 = vunpack.c.h.b16 %v163
    %v281 = vunpack.c.l.b16 %v164
    %v282 = vunpack.c.h.b16 %v164
    %v283 = vpack.c.b16 %v223, %v219
    %v284 = vpack.c.b16 %v224, %v220
    %v285 = vpack.c.b16 %v225, %v221
    %v286 = vpack.c.b16 %v226, %v222
    %v287 = vpack.c.b16 %v231, %v227
    %v288 = vpack.c.b16 %v232, %v228
    %v289 = vpack.c.b16 %v233, %v229
    %v290 = vpack.c.b16 %v234, %v230
    %v291 = vpack.c.b16 %v239, %v235
    %v292 = vpack.c.b16 %v240, %v236
    %v293 = vpack.c.b16 %v241, %v237
    %v294 = vpack.c.b16 %v242, %v238
    %v295 = vpack.c.b16 %v247, %v243
    %v296 = vpack.c.b16 %v248, %v244
    %v297 = vpack.c.b16 %v249, %v245
    %v298 = vpack.c.b16 %v250, %v246
    %v299 = vpack.c.b16 %v255, %v251
    %v300 = vpack.c.b16 %v256, %v252
    %v301 = vpack.c.b16 %v257, %v253
    %v302 = vpack.c.b16 %v258, %v254
    %v303 = vpack.c.b16 %v263, %v259
    %v304 = vpack.c.b16 %v264, %v260
    %v305 = vpack.c.b16 %v265, %v261
    %v306 = vpack.c.b16 %v266, %v262
    %v307 = vpack.c.b16 %v271, %v267
    %v308 = vpack.c.b16 %v272, %v268
    %v309 = vpack.c.b16 %v273, %v269
    %v310 = vpack.c.b16 %v274, %v270
    %v311 = vpack.c.b16 %v279, %v275
    %v312 = vpack.c.b16 %v280, %v276
    %v313 = vpack.c.b16 %v281, %v277
    %v314 = vpack.c.b16 %v282, %v278
    %347 = vmatprep.subr.bf16.mxu0 %v284
    %348 = vmatpush1.bf16.msra.mxu0 %v283
    %349 = vmatprep.subr.bf16.mxu0 %v288
    %350 = vmatpush1.bf16.msra.mxu0 %v287
    %351 = vmatprep.subr.bf16.mxu0 %v292
    %352 = vmatpush1.bf16.msra.mxu0 %v291
    %353 = vmatprep.subr.bf16.mxu0 %v296
    %354 = vmatpush1.bf16.msra.mxu0 %v295
    %355 = vmatprep.subr.bf16.mxu0 %v300
    %356 = vmatpush1.bf16.msra.mxu0 %v299
    %357 = vmatprep.subr.bf16.mxu0 %v304
    %358 = vmatpush1.bf16.msra.mxu0 %v303
    %359 = vmatprep.subr.bf16.mxu0 %v308
    %360 = vmatpush1.bf16.msra.mxu0 %v307
    %361 = vmatprep.subr.bf16.mxu0 %v312
    %362 = vmatpush1.bf16.msra.mxu0 %v311
    %363 = vmatprep.subr.bf16.mxu0 0
    %364 = vmatpush1.bf16.msra.mxu0 0
    %365 = vmatprep.subr.bf16.mxu0 0
    %366 = vmatpush1.bf16.msra.mxu0 0
    %367 = vmatprep.subr.bf16.mxu0 0
    %368 = vmatpush1.bf16.msra.mxu0 0
    %369 = vmatprep.subr.bf16.mxu0 0
    %370 = vmatpush1.bf16.msra.mxu0 0
    %371 = vmatprep.subr.bf16.mxu0 0
    %372 = vmatpush1.bf16.msra.mxu0 0
    %373 = vmatprep.subr.bf16.mxu0 0
    %374 = vmatpush1.bf16.msra.mxu0 0
    %375 = vmatprep.subr.bf16.mxu0 0
    %376 = vmatpush1.bf16.msra.mxu0 0
    %377 = vmatprep.subr.bf16.mxu0 0
    %378 = vmatpush1.bf16.msra.mxu0 0
    %379 = vmatprep.mubr.bf16.mxu0 0
    %380 = vmatmul.mubr.bf16.gmra.mrb[0].mxu0 %v132
    %v381 = vpop.f32.mrb[0].mxu0
    %v382 = vadd.f32 %v170, %v381
    %v383 = vpop.f32.mrb[0].mxu0
    %v384 = vadd.f32 %v174, %v383
    %v385 = vpop.f32.mrb[0].mxu0
    %v386 = vadd.f32 %v170, %v385
    %v387 = vpop.f32.mrb[0].mxu0
    %v388 = vadd.f32 %v174, %v387
    %389 = vdwg.mxu0
    %390 = vmatprep.subr.bf16.mxu0 %v286
    %391 = vmatpush1.bf16.msra.mxu0 %v285
    %392 = vmatprep.subr.bf16.mxu0 %v290
    %393 = vmatpush1.bf16.msra.mxu0 %v289
    %394 = vmatprep.subr.bf16.mxu0 %v294
    %395 = vmatpush1.bf16.msra.mxu0 %v293
    %396 = vmatprep.subr.bf16.mxu0 %v298
    %397 = vmatpush1.bf16.msra.mxu0 %v297
    %398 = vmatprep.subr.bf16.mxu0 %v302
    %399 = vmatpush1.bf16.msra.mxu0 %v301
    %400 = vmatprep.subr.bf16.mxu0 %v306
    %401 = vmatpush1.bf16.msra.mxu0 %v305
    %402 = vmatprep.subr.bf16.mxu0 %v310
    %403 = vmatpush1.bf16.msra.mxu0 %v309
    %404 = vmatprep.subr.bf16.mxu0 %v314
    %405 = vmatpush1.bf16.msra.mxu0 %v313
    %406 = vmatprep.subr.bf16.mxu0 0
    %407 = vmatpush1.bf16.msra.mxu0 0
    %408 = vmatprep.subr.bf16.mxu0 0
    %409 = vmatpush1.bf16.msra.mxu0 0
    %410 = vmatprep.subr.bf16.mxu0 0
    %411 = vmatpush1.bf16.msra.mxu0 0
    %412 = vmatprep.subr.bf16.mxu0 0
    %413 = vmatpush1.bf16.msra.mxu0 0
    %414 = vmatprep.subr.bf16.mxu0 0
    %415 = vmatpush1.bf16.msra.mxu0 0
    %416 = vmatprep.subr.bf16.mxu0 0
    %417 = vmatpush1.bf16.msra.mxu0 0
    %418 = vmatprep.subr.bf16.mxu0 0
    %419 = vmatpush1.bf16.msra.mxu0 0
    %420 = vmatprep.subr.bf16.mxu0 0
    %421 = vmatpush1.bf16.msra.mxu0 0
    %422 = vmatprep.mubr.bf16.mxu0 0
    %423 = vmatmul.mubr.bf16.gmra.mrb[0].mxu0 %v132
    %v424 = vpop.f32.mrb[0].mxu0
    %v425 = vadd.f32 %v178, %v424
    %v426 = vpop.f32.mrb[0].mxu0
    %v427 = vadd.f32 %v182, %v426
    %v428 = vpop.f32.mrb[0].mxu0
    %v429 = vadd.f32 %v178, %v428
    %v430 = vpop.f32.mrb[0].mxu0
    %v431 = vadd.f32 %v182, %v430
    %432 = vdwg.mxu0
    %v433 = vmax.f32 %v382, 0.0
    %v434 = vmax.f32 %v384, 0.0
    %v435 = vmax.f32 %v425, 0.0
    %v436 = vmax.f32 %v427, 0.0
    %v437 = vmax.f32 %v386, 0.0
    %v438 = vmax.f32 %v388, 0.0
    %v439 = vmax.f32 %v429, 0.0
    %v440 = vmax.f32 %v431, 0.0
    %v441 = vpack.c.bf16 %v437, %v433
    %v442 = vpack.c.bf16 %v438, %v434
    %v443 = vpack.c.bf16 %v439, %v435
    %v444 = vpack.c.bf16 %v440, %v436
    %v445 = vld [vmem:[#allocation8] sm:$0xff]
    %v446 = vld [vmem:[#allocation8 + $0x8] sm:$0xff]
    %v447 = vld [vmem:[#allocation8 + $0x10] sm:$0xff]
    %v448 = vld [vmem:[#allocation8 + $0x18] sm:$0xff]
    %v449 = vld [vmem:[#allocation8 + $0x20] sm:$0xff]
    %v450 = vld [vmem:[#allocation8 + $0x28] sm:$0xff]
    %v451 = vld [vmem:[#allocation8 + $0x30] sm:$0xff]
    %v452 = vld [vmem:[#allocation8 + $0x38] sm:$0xff]
    %v453 = vld [vmem:[#allocation8 + $0x40] sm:$0xff]
    %v454 = vld [vmem:[#allocation8 + $0x48] sm:$0xff]
    %v455 = vld [vmem:[#allocation8 + $0x50] sm:$0xff]
    %v456 = vld [vmem:[#allocation8 + $0x58] sm:$0xff]
    %v457 = vld [vmem:[#allocation8 + $0x60] sm:$0xff]
    %v458 = vld [vmem:[#allocation8 + $0x68] sm:$0xff]
    %v459 = vld [vmem:[#allocation8 + $0x70] sm:$0xff]
    %v460 = vld [vmem:[#allocation8 + $0x78] sm:$0xff]
    %v461 = vld [vmem:[#allocation8 + $0x80] sm:$0xff]
    %v462 = vld [vmem:[#allocation8 + $0x88] sm:$0xff]
    %v463 = vld [vmem:[#allocation8 + $0x90] sm:$0xff]
    %v464 = vld [vmem:[#allocation8 + $0x98] sm:$0xff]
    %v465 = vld [vmem:[#allocation8 + $0xa0] sm:$0xff]
    %v466 = vld [vmem:[#allocation8 + $0xa8] sm:$0xff]
    %v467 = vld [vmem:[#allocation8 + $0xb0] sm:$0xff]
    %v468 = vld [vmem:[#allocation8 + $0xb8] sm:$0xff]
    %v469 = vld [vmem:[#allocation8 + $0xc0] sm:$0xff]
    %v470 = vld [vmem:[#allocation8 + $0xc8] sm:$0xff]
    %v471 = vld [vmem:[#allocation8 + $0xd0] sm:$0xff]
    %v472 = vld [vmem:[#allocation8 + $0xd8] sm:$0xff]
    %v473 = vld [vmem:[#allocation8 + $0xe0] sm:$0xff]
    %v474 = vld [vmem:[#allocation8 + $0xe8] sm:$0xff]
    %v475 = vld [vmem:[#allocation8 + $0xf0] sm:$0xff]
    %v476 = vld [vmem:[#allocation8 + $0xf8] sm:$0xff]
    %v477 = vld [vmem:[#allocation8 + $0x100] sm:$0xff]
    %v478 = vld [vmem:[#allocation8 + $0x108] sm:$0xff]
    %v479 = vld [vmem:[#allocation8 + $0x110] sm:$0xff]
    %v480 = vld [vmem:[#allocation8 + $0x118] sm:$0xff]
    %v481 = vld [vmem:[#allocation8 + $0x120] sm:$0xff]
    %v482 = vld [vmem:[#allocation8 + $0x128] sm:$0xff]
    %v483 = vld [vmem:[#allocation8 + $0x130] sm:$0xff]
    %v484 = vld [vmem:[#allocation8 + $0x138] sm:$0xff]
    %v485 = vld [vmem:[#allocation8 + $0x140] sm:$0xff]
    %v486 = vld [vmem:[#allocation8 + $0x148] sm:$0xff]
    %v487 = vld [vmem:[#allocation8 + $0x150] sm:$0xff]
    %v488 = vld [vmem:[#allocation8 + $0x158] sm:$0xff]
    %v489 = vld [vmem:[#allocation8 + $0x160] sm:$0xff]
    %v490 = vld [vmem:[#allocation8 + $0x168] sm:$0xff]
    %v491 = vld [vmem:[#allocation8 + $0x170] sm:$0xff]
    %v492 = vld [vmem:[#allocation8 + $0x178] sm:$0xff]
    %v493 = vld [vmem:[#allocation8 + $0x180] sm:$0xff]
    %v494 = vld [vmem:[#allocation8 + $0x188] sm:$0xff]
    %v495 = vld [vmem:[#allocation8 + $0x190] sm:$0xff]
    %v496 = vld [vmem:[#allocation8 + $0x198] sm:$0xff]
    %v497 = vld [vmem:[#allocation8 + $0x1a0] sm:$0xff]
    %v498 = vld [vmem:[#allocation8 + $0x1a8] sm:$0xff]
    %v499 = vld [vmem:[#allocation8 + $0x1b0] sm:$0xff]
    %v500 = vld [vmem:[#allocation8 + $0x1b8] sm:$0xff]
    %v501 = vld [vmem:[#allocation8 + $0x1c0] sm:$0xff]
    %v502 = vld [vmem:[#allocation8 + $0x1c8] sm:$0xff]
    %v503 = vld [vmem:[#allocation8 + $0x1d0] sm:$0xff]
    %v504 = vld [vmem:[#allocation8 + $0x1d8] sm:$0xff]
    %v505 = vld [vmem:[#allocation8 + $0x1e0] sm:$0xff]
    %v506 = vld [vmem:[#allocation8 + $0x1e8] sm:$0xff]
    %v507 = vld [vmem:[#allocation8 + $0x1f0] sm:$0xff]
    %v508 = vld [vmem:[#allocation8 + $0x1f8] sm:$0xff]
    %v509 = vld [vmem:[%s4] sm:$0x3]
    %v511 = vlaneseq
    %v512 = vshrl.u32 %v511, 7
    %v513 = vsub.s32 0, %v512
    %v514 = vrot.slane %v509, %v513
    %v515 = vlaneseq
    %v516 = vshrl.u32 %v515, 7
    %v517 = vsub.s32 1, %v516
    %v518 = vrot.slane %v509, %v517
    %v585 = vunpack.c.l.b16 %v445
    %v586 = vunpack.c.h.b16 %v445
    %v587 = vunpack.c.l.b16 %v446
    %v588 = vunpack.c.h.b16 %v446
    %v589 = vunpack.c.l.b16 %v447
    %v590 = vunpack.c.h.b16 %v447
    %v591 = vunpack.c.l.b16 %v448
    %v592 = vunpack.c.h.b16 %v448
    %v593 = vunpack.c.l.b16 %v449
    %v594 = vunpack.c.h.b16 %v449
    %v595 = vunpack.c.l.b16 %v450
    %v596 = vunpack.c.h.b16 %v450
    %v597 = vunpack.c.l.b16 %v451
    %v598 = vunpack.c.h.b16 %v451
    %v599 = vunpack.c.l.b16 %v452
    %v600 = vunpack.c.h.b16 %v452
    %v601 = vunpack.c.l.b16 %v453
    %v602 = vunpack.c.h.b16 %v453
    %v603 = vunpack.c.l.b16 %v454
    %v604 = vunpack.c.h.b16 %v454
    %v605 = vunpack.c.l.b16 %v455
    %v606 = vunpack.c.h.b16 %v455
    %v607 = vunpack.c.l.b16 %v456
    %v608 = vunpack.c.h.b16 %v456
    %v609 = vunpack.c.l.b16 %v457
    %v610 = vunpack.c.h.b16 %v457
    %v611 = vunpack.c.l.b16 %v458
    %v612 = vunpack.c.h.b16 %v458
    %v613 = vunpack.c.l.b16 %v459
    %v614 = vunpack.c.h.b16 %v459
    %v615 = vunpack.c.l.b16 %v460
    %v616 = vunpack.c.h.b16 %v460
    %v617 = vunpack.c.l.b16 %v461
    %v618 = vunpack.c.h.b16 %v461
    %v619 = vunpack.c.l.b16 %v462
    %v620 = vunpack.c.h.b16 %v462
    %v621 = vunpack.c.l.b16 %v463
    %v622 = vunpack.c.h.b16 %v463
    %v623 = vunpack.c.l.b16 %v464
    %v624 = vunpack.c.h.b16 %v464
    %v625 = vunpack.c.l.b16 %v465
    %v626 = vunpack.c.h.b16 %v465
    %v627 = vunpack.c.l.b16 %v466
    %v628 = vunpack.c.h.b16 %v466
    %v629 = vunpack.c.l.b16 %v467
    %v630 = vunpack.c.h.b16 %v467
    %v631 = vunpack.c.l.b16 %v468
    %v632 = vunpack.c.h.b16 %v468
    %v633 = vunpack.c.l.b16 %v469
    %v634 = vunpack.c.h.b16 %v469
    %v635 = vunpack.c.l.b16 %v470
    %v636 = vunpack.c.h.b16 %v470
    %v637 = vunpack.c.l.b16 %v471
    %v638 = vunpack.c.h.b16 %v471
    %v639 = vunpack.c.l.b16 %v472
    %v640 = vunpack.c.h.b16 %v472
    %v641 = vunpack.c.l.b16 %v473
    %v642 = vunpack.c.h.b16 %v473
    %v643 = vunpack.c.l.b16 %v474
    %v644 = vunpack.c.h.b16 %v474
    %v645 = vunpack.c.l.b16 %v475
    %v646 = vunpack.c.h.b16 %v475
    %v647 = vunpack.c.l.b16 %v476
    %v648 = vunpack.c.h.b16 %v476
    %v649 = vunpack.c.l.b16 %v477
    %v650 = vunpack.c.h.b16 %v477
    %v651 = vunpack.c.l.b16 %v478
    %v652 = vunpack.c.h.b16 %v478
    %v653 = vunpack.c.l.b16 %v479
    %v654 = vunpack.c.h.b16 %v479
    %v655 = vunpack.c.l.b16 %v480
    %v656 = vunpack.c.h.b16 %v480
    %v657 = vunpack.c.l.b16 %v481
    %v658 = vunpack.c.h.b16 %v481
    %v659 = vunpack.c.l.b16 %v482
    %v660 = vunpack.c.h.b16 %v482
    %v661 = vunpack.c.l.b16 %v483
    %v662 = vunpack.c.h.b16 %v483
    %v663 = vunpack.c.l.b16 %v484
    %v664 = vunpack.c.h.b16 %v484
    %v665 = vunpack.c.l.b16 %v485
    %v666 = vunpack.c.h.b16 %v485
    %v667 = vunpack.c.l.b16 %v486
    %v668 = vunpack.c.h.b16 %v486
    %v669 = vunpack.c.l.b16 %v487
    %v670 = vunpack.c.h.b16 %v487
    %v671 = vunpack.c.l.b16 %v488
    %v672 = vunpack.c.h.b16 %v488
    %v673 = vunpack.c.l.b16 %v489
    %v674 = vunpack.c.h.b16 %v489
    %v675 = vunpack.c.l.b16 %v490
    %v676 = vunpack.c.h.b16 %v490
    %v677 = vunpack.c.l.b16 %v491
    %v678 = vunpack.c.h.b16 %v491
    %v679 = vunpack.c.l.b16 %v492
    %v680 = vunpack.c.h.b16 %v492
    %v681 = vunpack.c.l.b16 %v493
    %v682 = vunpack.c.h.b16 %v493
    %v683 = vunpack.c.l.b16 %v494
    %v684 = vunpack.c.h.b16 %v494
    %v685 = vunpack.c.l.b16 %v495
    %v686 = vunpack.c.h.b16 %v495
    %v687 = vunpack.c.l.b16 %v496
    %v688 = vunpack.c.h.b16 %v496
    %v689 = vunpack.c.l.b16 %v497
    %v690 = vunpack.c.h.b16 %v497
    %v691 = vunpack.c.l.b16 %v498
    %v692 = vunpack.c.h.b16 %v498
    %v693 = vunpack.c.l.b16 %v499
    %v694 = vunpack.c.h.b16 %v499
    %v695 = vunpack.c.l.b16 %v500
    %v696 = vunpack.c.h.b16 %v500
    %v697 = vunpack.c.l.b16 %v501
    %v698 = vunpack.c.h.b16 %v501
    %v699 = vunpack.c.l.b16 %v502
    %v700 = vunpack.c.h.b16 %v502
    %v701 = vunpack.c.l.b16 %v503
    %v702 = vunpack.c.h.b16 %v503
    %v703 = vunpack.c.l.b16 %v504
    %v704 = vunpack.c.h.b16 %v504
    %v705 = vunpack.c.l.b16 %v505
    %v706 = vunpack.c.h.b16 %v505
    %v707 = vunpack.c.l.b16 %v506
    %v708 = vunpack.c.h.b16 %v506
    %v709 = vunpack.c.l.b16 %v507
    %v710 = vunpack.c.h.b16 %v507
    %v711 = vunpack.c.l.b16 %v508
    %v712 = vunpack.c.h.b16 %v508
    %v713 = vpack.c.b16 %v587, %v585
    %v714 = vpack.c.b16 %v588, %v586
    %v715 = vpack.c.b16 %v591, %v589
    %v716 = vpack.c.b16 %v592, %v590
    %v717 = vpack.c.b16 %v595, %v593
    %v718 = vpack.c.b16 %v596, %v594
    %v719 = vpack.c.b16 %v599, %v597
    %v720 = vpack.c.b16 %v600, %v598
    %v721 = vpack.c.b16 %v603, %v601
    %v722 = vpack.c.b16 %v604, %v602
    %v723 = vpack.c.b16 %v607, %v605
    %v724 = vpack.c.b16 %v608, %v606
    %v725 = vpack.c.b16 %v611, %v609
    %v726 = vpack.c.b16 %v612, %v610
    %v727 = vpack.c.b16 %v615, %v613
    %v728 = vpack.c.b16 %v616, %v614
    %v729 = vpack.c.b16 %v619, %v617
    %v730 = vpack.c.b16 %v620, %v618
    %v731 = vpack.c.b16 %v623, %v621
    %v732 = vpack.c.b16 %v624, %v622
    %v733 = vpack.c.b16 %v627, %v625
    %v734 = vpack.c.b16 %v628, %v626
    %v735 = vpack.c.b16 %v631, %v629
    %v736 = vpack.c.b16 %v632, %v630
    %v737 = vpack.c.b16 %v635, %v633
    %v738 = vpack.c.b16 %v636, %v634
    %v739 = vpack.c.b16 %v639, %v637
    %v740 = vpack.c.b16 %v640, %v638
    %v741 = vpack.c.b16 %v643, %v641
    %v742 = vpack.c.b16 %v644, %v642
    %v743 = vpack.c.b16 %v647, %v645
    %v744 = vpack.c.b16 %v648, %v646
    %v745 = vpack.c.b16 %v651, %v649
    %v746 = vpack.c.b16 %v652, %v650
    %v747 = vpack.c.b16 %v655, %v653
    %v748 = vpack.c.b16 %v656, %v654
    %v749 = vpack.c.b16 %v659, %v657
    %v750 = vpack.c.b16 %v660, %v658
    %v751 = vpack.c.b16 %v663, %v661
    %v752 = vpack.c.b16 %v664, %v662
    %v753 = vpack.c.b16 %v667, %v665
    %v754 = vpack.c.b16 %v668, %v666
    %v755 = vpack.c.b16 %v671, %v669
    %v756 = vpack.c.b16 %v672, %v670
    %v757 = vpack.c.b16 %v675, %v673
    %v758 = vpack.c.b16 %v676, %v674
    %v759 = vpack.c.b16 %v679, %v677
    %v760 = vpack.c.b16 %v680, %v678
    %v761 = vpack.c.b16 %v683, %v681
    %v762 = vpack.c.b16 %v684, %v682
    %v763 = vpack.c.b16 %v687, %v685
    %v764 = vpack.c.b16 %v688, %v686
    %v765 = vpack.c.b16 %v691, %v689
    %v766 = vpack.c.b16 %v692, %v690
    %v767 = vpack.c.b16 %v695, %v693
    %v768 = vpack.c.b16 %v696, %v694
    %v769 = vpack.c.b16 %v699, %v697
    %v770 = vpack.c.b16 %v700, %v698
    %v771 = vpack.c.b16 %v703, %v701
    %v772 = vpack.c.b16 %v704, %v702
    %v773 = vpack.c.b16 %v707, %v705
    %v774 = vpack.c.b16 %v708, %v706
    %v775 = vpack.c.b16 %v711, %v709
    %v776 = vpack.c.b16 %v712, %v710
    %841 = vmatprep.subr.bf16.mxu0 %v714
    %842 = vmatpush1.bf16.msra.mxu0 %v713
    %843 = vmatprep.subr.bf16.mxu0 %v716
    %844 = vmatpush1.bf16.msra.mxu0 %v715
    %845 = vmatprep.subr.bf16.mxu0 %v718
    %846 = vmatpush1.bf16.msra.mxu0 %v717
    %847 = vmatprep.subr.bf16.mxu0 %v720
    %848 = vmatpush1.bf16.msra.mxu0 %v719
    %849 = vmatprep.subr.bf16.mxu0 %v722
    %850 = vmatpush1.bf16.msra.mxu0 %v721
    %851 = vmatprep.subr.bf16.mxu0 %v724
    %852 = vmatpush1.bf16.msra.mxu0 %v723
    %853 = vmatprep.subr.bf16.mxu0 %v726
    %854 = vmatpush1.bf16.msra.mxu0 %v725
    %855 = vmatprep.subr.bf16.mxu0 %v728
    %856 = vmatpush1.bf16.msra.mxu0 %v727
    %857 = vmatprep.subr.bf16.mxu0 %v730
    %858 = vmatpush1.bf16.msra.mxu0 %v729
    %859 = vmatprep.subr.bf16.mxu0 %v732
    %860 = vmatpush1.bf16.msra.mxu0 %v731
    %861 = vmatprep.subr.bf16.mxu0 %v734
    %862 = vmatpush1.bf16.msra.mxu0 %v733
    %863 = vmatprep.subr.bf16.mxu0 %v736
    %864 = vmatpush1.bf16.msra.mxu0 %v735
    %865 = vmatprep.subr.bf16.mxu0 %v738
    %866 = vmatpush1.bf16.msra.mxu0 %v737
    %867 = vmatprep.subr.bf16.mxu0 %v740
    %868 = vmatpush1.bf16.msra.mxu0 %v739
    %869 = vmatprep.subr.bf16.mxu0 %v742
    %870 = vmatpush1.bf16.msra.mxu0 %v741
    %871 = vmatprep.subr.bf16.mxu0 %v744
    %872 = vmatpush1.bf16.msra.mxu0 %v743
    %873 = vmatprep.mubr.bf16.mxu0 %v442
    %874 = vmatmul.mubr.bf16.gmra.mrb[0].mxu0 %v441
    %v875 = vpop.f32.mrb[0].mxu0
    %v876 = vadd.f32 %v514, %v875
    %v877 = vpop.f32.mrb[0].mxu0
    %v878 = vadd.f32 %v518, %v877
    %v879 = vpop.f32.mrb[0].mxu0
    %v880 = vadd.f32 %v514, %v879
    %v881 = vpop.f32.mrb[0].mxu0
    %v882 = vadd.f32 %v518, %v881
    %883 = vdwg.mxu0
    %884 = vmatprep.subr.bf16.mxu0 %v746
    %885 = vmatpush1.bf16.msra.mxu0 %v745
    %886 = vmatprep.subr.bf16.mxu0 %v748
    %887 = vmatpush1.bf16.msra.mxu0 %v747
    %888 = vmatprep.subr.bf16.mxu0 %v750
    %889 = vmatpush1.bf16.msra.mxu0 %v749
    %890 = vmatprep.subr.bf16.mxu0 %v752
    %891 = vmatpush1.bf16.msra.mxu0 %v751
    %892 = vmatprep.subr.bf16.mxu0 %v754
    %893 = vmatpush1.bf16.msra.mxu0 %v753
    %894 = vmatprep.subr.bf16.mxu0 %v756
    %895 = vmatpush1.bf16.msra.mxu0 %v755
    %896 = vmatprep.subr.bf16.mxu0 %v758
    %897 = vmatpush1.bf16.msra.mxu0 %v757
    %898 = vmatprep.subr.bf16.mxu0 %v760
    %899 = vmatpush1.bf16.msra.mxu0 %v759
    %900 = vmatprep.subr.bf16.mxu0 %v762
    %901 = vmatpush1.bf16.msra.mxu0 %v761
    %902 = vmatprep.subr.bf16.mxu0 %v764
    %903 = vmatpush1.bf16.msra.mxu0 %v763
    %904 = vmatprep.subr.bf16.mxu0 %v766
    %905 = vmatpush1.bf16.msra.mxu0 %v765
    %906 = vmatprep.subr.bf16.mxu0 %v768
    %907 = vmatpush1.bf16.msra.mxu0 %v767
    %908 = vmatprep.subr.bf16.mxu0 %v770
    %909 = vmatpush1.bf16.msra.mxu0 %v769
    %910 = vmatprep.subr.bf16.mxu0 %v772
    %911 = vmatpush1.bf16.msra.mxu0 %v771
    %912 = vmatprep.subr.bf16.mxu0 %v774
    %913 = vmatpush1.bf16.msra.mxu0 %v773
    %914 = vmatprep.subr.bf16.mxu0 %v776
    %915 = vmatpush1.bf16.msra.mxu0 %v775
    %916 = vmatprep.mubr.bf16.mxu0 %v444
    %917 = vmatmul.mubr.bf16.gmra.mrb[0].mxu0 %v443
    %v918 = vpop.f32.mrb[0].mxu0
    %v919 = vadd.f32 %v876, %v918
    %v920 = vpop.f32.mrb[0].mxu0
    %v921 = vadd.f32 %v878, %v920
    %v922 = vpop.f32.mrb[0].mxu0
    %v923 = vadd.f32 %v880, %v922
    %v924 = vpop.f32.mrb[0].mxu0
    %v925 = vadd.f32 %v882, %v924
    %926 = vdwg.mxu0
    %v927 = vmax.f32 %v919, 0.0
    %v928 = vmax.f32 %v921, 0.0
    %v929 = vmax.f32 %v923, 0.0
    %v930 = vmax.f32 %v925, 0.0
    %v931 = vpack.c.bf16 %v929, %v927
    %v932 = vpack.c.bf16 %v930, %v928
    %v933 = vld [vmem:[#allocation9] sm:$0xf]
    %v934 = vld [vmem:[#allocation9 + $0x4] sm:$0xf]
    %v935 = vld [vmem:[#allocation9 + $0x8] sm:$0xf]
    %v936 = vld [vmem:[#allocation9 + $0xc] sm:$0xf]
    %v937 = vld [vmem:[#allocation9 + $0x10] sm:$0xf]
    %v938 = vld [vmem:[#allocation9 + $0x14] sm:$0xf]
    %v939 = vld [vmem:[#allocation9 + $0x18] sm:$0xf]
    %v940 = vld [vmem:[#allocation9 + $0x1c] sm:$0xf]
    %v941 = vld [vmem:[#allocation9 + $0x20] sm:$0xf]
    %v942 = vld [vmem:[#allocation9 + $0x24] sm:$0xf]
    %v943 = vld [vmem:[#allocation9 + $0x28] sm:$0xf]
    %v944 = vld [vmem:[#allocation9 + $0x2c] sm:$0xf]
    %v945 = vld [vmem:[#allocation9 + $0x30] sm:$0xf]
    %v946 = vld [vmem:[#allocation9 + $0x34] sm:$0xf]
    %v947 = vld [vmem:[#allocation9 + $0x38] sm:$0xf]
    %v948 = vld [vmem:[#allocation9 + $0x3c] sm:$0xf]
    %v949 = vld [vmem:[#allocation9 + $0x40] sm:$0xf]
    %v950 = vld [vmem:[#allocation9 + $0x44] sm:$0xf]
    %v951 = vld [vmem:[#allocation9 + $0x48] sm:$0xf]
    %v952 = vld [vmem:[#allocation9 + $0x4c] sm:$0xf]
    %v953 = vld [vmem:[#allocation9 + $0x50] sm:$0xf]
    %v954 = vld [vmem:[#allocation9 + $0x54] sm:$0xf]
    %v955 = vld [vmem:[#allocation9 + $0x58] sm:$0xf]
    %v956 = vld [vmem:[#allocation9 + $0x5c] sm:$0xf]
    %v957 = vld [vmem:[#allocation9 + $0x60] sm:$0xf]
    %v958 = vld [vmem:[#allocation9 + $0x64] sm:$0xf]
    %v959 = vld [vmem:[#allocation9 + $0x68] sm:$0xf]
    %v960 = vld [vmem:[#allocation9 + $0x6c] sm:$0xf]
    %v961 = vld [vmem:[#allocation9 + $0x70] sm:$0xf]
    %v962 = vld [vmem:[#allocation9 + $0x74] sm:$0xf]
    %v963 = vld [vmem:[#allocation9 + $0x78] sm:$0xf]
    %v964 = vld [vmem:[#allocation9 + $0x7c] sm:$0xf]
    %v965 = vld [vmem:[%s6] sm:$0x1]
    %v967 = vlaneseq
    %v968 = vshrl.u32 %v967, 7
    %v969 = vsub.s32 0, %v968
    %v970 = vrot.slane %v965, %v969
    %v1004 = vunpack.c.l.b16 %v933
    %v1005 = vunpack.c.l.b16 %v934
    %v1006 = vunpack.c.l.b16 %v935
    %v1007 = vunpack.c.l.b16 %v936
    %v1008 = vunpack.c.l.b16 %v937
    %v1009 = vunpack.c.l.b16 %v938
    %v1010 = vunpack.c.l.b16 %v939
    %v1011 = vunpack.c.l.b16 %v940
    %v1012 = vunpack.c.l.b16 %v941
    %v1013 = vunpack.c.l.b16 %v942
    %v1014 = vunpack.c.l.b16 %v943
    %v1015 = vunpack.c.l.b16 %v944
    %v1016 = vunpack.c.l.b16 %v945
    %v1017 = vunpack.c.l.b16 %v946
    %v1018 = vunpack.c.l.b16 %v947
    %v1019 = vunpack.c.l.b16 %v948
    %v1020 = vunpack.c.l.b16 %v949
    %v1021 = vunpack.c.l.b16 %v950
    %v1022 = vunpack.c.l.b16 %v951
    %v1023 = vunpack.c.l.b16 %v952
    %v1024 = vunpack.c.l.b16 %v953
    %v1025 = vunpack.c.l.b16 %v954
    %v1026 = vunpack.c.l.b16 %v955
    %v1027 = vunpack.c.l.b16 %v956
    %v1028 = vunpack.c.l.b16 %v957
    %v1029 = vunpack.c.l.b16 %v958
    %v1030 = vunpack.c.l.b16 %v959
    %v1031 = vunpack.c.l.b16 %v960
    %v1032 = vunpack.c.l.b16 %v961
    %v1033 = vunpack.c.l.b16 %v962
    %v1034 = vunpack.c.l.b16 %v963
    %v1035 = vunpack.c.l.b16 %v964
    %v1036 = vpack.c.b16 %v1005, %v1004
    %v1037 = vpack.c.b16 %v1007, %v1006
    %v1038 = vpack.c.b16 %v1009, %v1008
    %v1039 = vpack.c.b16 %v1011, %v1010
    %v1040 = vpack.c.b16 %v1013, %v1012
    %v1041 = vpack.c.b16 %v1015, %v1014
    %v1042 = vpack.c.b16 %v1017, %v1016
    %v1043 = vpack.c.b16 %v1019, %v1018
    %v1044 = vpack.c.b16 %v1021, %v1020
    %v1045 = vpack.c.b16 %v1023, %v1022
    %v1046 = vpack.c.b16 %v1025, %v1024
    %v1047 = vpack.c.b16 %v1027, %v1026
    %v1048 = vpack.c.b16 %v1029, %v1028
    %v1049 = vpack.c.b16 %v1031, %v1030
    %v1050 = vpack.c.b16 %v1033, %v1032
    %v1051 = vpack.c.b16 %v1035, %v1034
    %1068 = vmatprep.subr.bf16.mxu0 0
    %1069 = vmatpush1.bf16.msra.mxu0 %v1036
    %1070 = vmatprep.subr.bf16.mxu0 0
    %1071 = vmatpush1.bf16.msra.mxu0 %v1037
    %1072 = vmatprep.subr.bf16.mxu0 0
    %1073 = vmatpush1.bf16.msra.mxu0 %v1038
    %1074 = vmatprep.subr.bf16.mxu0 0
    %1075 = vmatpush1.bf16.msra.mxu0 %v1039
    %1076 = vmatprep.subr.bf16.mxu0 0
    %1077 = vmatpush1.bf16.msra.mxu0 %v1040
    %1078 = vmatprep.subr.bf16.mxu0 0
    %1079 = vmatpush1.bf16.msra.mxu0 %v1041
    %1080 = vmatprep.subr.bf16.mxu0 0
    %1081 = vmatpush1.bf16.msra.mxu0 %v1042
    %1082 = vmatprep.subr.bf16.mxu0 0
    %1083 = vmatpush1.bf16.msra.mxu0 %v1043
    %1084 = vmatprep.subr.bf16.mxu0 0
    %1085 = vmatpush1.bf16.msra.mxu0 %v1044
    %1086 = vmatprep.subr.bf16.mxu0 0
    %1087 = vmatpush1.bf16.msra.mxu0 %v1045
    %1088 = vmatprep.subr.bf16.mxu0 0
    %1089 = vmatpush1.bf16.msra.mxu0 %v1046
    %1090 = vmatprep.subr.bf16.mxu0 0
    %1091 = vmatpush1.bf16.msra.mxu0 %v1047
    %1092 = vmatprep.subr.bf16.mxu0 0
    %1093 = vmatpush1.bf16.msra.mxu0 %v1048
    %1094 = vmatprep.subr.bf16.mxu0 0
    %1095 = vmatpush1.bf16.msra.mxu0 %v1049
    %1096 = vmatprep.subr.bf16.mxu0 0
    %1097 = vmatpush1.bf16.msra.mxu0 %v1050
    %1098 = vmatprep.subr.bf16.mxu0 0
    %1099 = vmatpush1.bf16.msra.mxu0 %v1051
    %1100 = vmatprep.mubr.bf16.mxu0 %v932
    %1101 = vmatmul.mubr.bf16.gmra.mrb[0].mxu0 %v931
    %v1102 = vpop.f32.mrb[0].mxu0
    %v1103 = vadd.f32 %v970, %v1102
    %v1104 = vpop.f32.mrb[0].mxu0
    %v1105 = vpop.f32.mrb[0].mxu0
    %v1106 = vadd.f32 %v970, %v1105
    %v1107 = vpop.f32.mrb[0].mxu0
    %1108 = vdwg.mxu0
    %v1109 = vmax.f32 %v1103, 0.0
    %v1110 = vmax.f32 %v1106, 0.0
    %v1111 = vpack.c.bf16 %v1110, %v1109
    %v1112 = vld [vmem:[#allocation11] sm:$0xf]
    %v1113 = vld [vmem:[#allocation11 + $0x4] sm:$0xf]
    %v1114 = vld [vmem:[#allocation11 + $0x8] sm:$0xf]
    %v1115 = vld [vmem:[#allocation11 + $0xc] sm:$0xf]
    %v1116 = vld [vmem:[#allocation11 + $0x10] sm:$0xf]
    %v1117 = vld [vmem:[#allocation11 + $0x14] sm:$0xf]
    %v1118 = vld [vmem:[#allocation11 + $0x18] sm:$0xf]
    %v1119 = vld [vmem:[#allocation11 + $0x1c] sm:$0xf]
    %v1120 = vld [vmem:[#allocation11 + $0x20] sm:$0xf]
    %v1121 = vld [vmem:[#allocation11 + $0x24] sm:$0xf]
    %v1122 = vld [vmem:[#allocation11 + $0x28] sm:$0xf]
    %v1123 = vld [vmem:[#allocation11 + $0x2c] sm:$0xf]
    %v1124 = vld [vmem:[#allocation11 + $0x30] sm:$0xf]
    %v1125 = vld [vmem:[#allocation11 + $0x34] sm:$0xf]
    %v1126 = vld [vmem:[#allocation11 + $0x38] sm:$0xf]
    %v1127 = vld [vmem:[#allocation11 + $0x3c] sm:$0xf]
    %v1128 = vld [vmem:[%s8] sm:$0x1]
    %v1130 = vlaneseq
    %v1131 = vshrl.u32 %v1130, 7
    %v1132 = vsub.s32 0, %v1131
    %v1133 = vrot.slane %v1128, %v1132
    %v1151 = vunpack.c.l.b16 %v1112
    %v1152 = vunpack.c.l.b16 %v1113
    %v1153 = vunpack.c.l.b16 %v1114
    %v1154 = vunpack.c.l.b16 %v1115
    %v1155 = vunpack.c.l.b16 %v1116
    %v1156 = vunpack.c.l.b16 %v1117
    %v1157 = vunpack.c.l.b16 %v1118
    %v1158 = vunpack.c.l.b16 %v1119
    %v1159 = vunpack.c.l.b16 %v1120
    %v1160 = vunpack.c.l.b16 %v1121
    %v1161 = vunpack.c.l.b16 %v1122
    %v1162 = vunpack.c.l.b16 %v1123
    %v1163 = vunpack.c.l.b16 %v1124
    %v1164 = vunpack.c.l.b16 %v1125
    %v1165 = vunpack.c.l.b16 %v1126
    %v1166 = vunpack.c.l.b16 %v1127
    %v1167 = vpack.c.b16 %v1152, %v1151
    %v1168 = vpack.c.b16 %v1154, %v1153
    %v1169 = vpack.c.b16 %v1156, %v1155
    %v1170 = vpack.c.b16 %v1158, %v1157
    %v1171 = vpack.c.b16 %v1160, %v1159
    %v1172 = vpack.c.b16 %v1162, %v1161
    %v1173 = vpack.c.b16 %v1164, %v1163
    %v1174 = vpack.c.b16 %v1166, %v1165
    %1183 = vmatprep.subr.bf16.mxu0 0
    %1184 = vmatpush1.bf16.msra.mxu0 %v1167
    %1185 = vmatprep.subr.bf16.mxu0 0
    %1186 = vmatpush1.bf16.msra.mxu0 %v1168
    %1187 = vmatprep.subr.bf16.mxu0 0
    %1188 = vmatpush1.bf16.msra.mxu0 %v1169
    %1189 = vmatprep.subr.bf16.mxu0 0
    %1190 = vmatpush1.bf16.msra.mxu0 %v1170
    %1191 = vmatprep.subr.bf16.mxu0 0
    %1192 = vmatpush1.bf16.msra.mxu0 %v1171
    %1193 = vmatprep.subr.bf16.mxu0 0
    %1194 = vmatpush1.bf16.msra.mxu0 %v1172
    %1195 = vmatprep.subr.bf16.mxu0 0
    %1196 = vmatpush1.bf16.msra.mxu0 %v1173
    %1197 = vmatprep.subr.bf16.mxu0 0
    %1198 = vmatpush1.bf16.msra.mxu0 %v1174
    %1199 = vmatprep.subr.bf16.mxu0 0
    %1200 = vmatpush1.bf16.msra.mxu0 0
    %1201 = vmatprep.subr.bf16.mxu0 0
    %1202 = vmatpush1.bf16.msra.mxu0 0
    %1203 = vmatprep.subr.bf16.mxu0 0
    %1204 = vmatpush1.bf16.msra.mxu0 0
    %1205 = vmatprep.subr.bf16.mxu0 0
    %1206 = vmatpush1.bf16.msra.mxu0 0
    %1207 = vmatprep.subr.bf16.mxu0 0
    %1208 = vmatpush1.bf16.msra.mxu0 0
    %1209 = vmatprep.subr.bf16.mxu0 0
    %1210 = vmatpush1.bf16.msra.mxu0 0
    %1211 = vmatprep.subr.bf16.mxu0 0
    %1212 = vmatpush1.bf16.msra.mxu0 0
    %1213 = vmatprep.subr.bf16.mxu0 0
    %1214 = vmatpush1.bf16.msra.mxu0 0
    %1215 = vmatprep.mubr.bf16.mxu0 0
    %1216 = vmatmul.mubr.bf16.gmra.mrb[0].mxu0 %v1111
    %v1217 = vpop.f32.mrb[0].mxu0
    %v1218 = vadd.f32 %v1133, %v1217
    %v1219 = vpop.f32.mrb[0].mxu0
    %v1220 = vpop.f32.mrb[0].mxu0
    %v1221 = vadd.f32 %v1133, %v1220
    %v1222 = vpop.f32.mrb[0].mxu0
    %1223 = vdwg.mxu0
    %v1224 = vmax.f32 %v1218, 0.0
    %v1225 = vmax.f32 %v1221, 0.0
    %v1226 = vpack.c.bf16 %v1225, %v1224
    %v1227 = vld [vmem:[#allocation12] sm:$0xf]
    %v1228 = vld [vmem:[#allocation12 + $0x4] sm:$0xf]
    %v1229 = vld [vmem:[#allocation12 + $0x8] sm:$0xf]
    %v1230 = vld [vmem:[#allocation12 + $0xc] sm:$0xf]
    %v1231 = vld [vmem:[#allocation12 + $0x10] sm:$0xf]
    %v1232 = vld [vmem:[#allocation12 + $0x14] sm:$0xf]
    %v1233 = vld [vmem:[#allocation12 + $0x18] sm:$0xf]
    %v1234 = vld [vmem:[#allocation12 + $0x1c] sm:$0xf]
    %v1235 = vld [vmem:[#allocation12 + $0x20] sm:$0xf]
    %v1236 = vld [vmem:[#allocation12 + $0x24] sm:$0xf]
    %v1237 = vld [vmem:[#allocation12 + $0x28] sm:$0xf]
    %v1238 = vld [vmem:[#allocation12 + $0x2c] sm:$0xf]
    %v1239 = vld [vmem:[#allocation12 + $0x30] sm:$0xf]
    %v1240 = vld [vmem:[#allocation12 + $0x34] sm:$0xf]
    %v1241 = vld [vmem:[#allocation12 + $0x38] sm:$0xf]
    %v1242 = vld [vmem:[#allocation12 + $0x3c] sm:$0xf]
    %v1243 = vld [vmem:[%s10] sm:$0x1]
    %v1245 = vlaneseq
    %v1246 = vshrl.u32 %v1245, 7
    %v1247 = vsub.s32 0, %v1246
    %v1248 = vrot.slane %v1243, %v1247
    %v1266 = vunpack.c.l.b16 %v1227
    %v1267 = vunpack.c.l.b16 %v1228
    %v1268 = vunpack.c.l.b16 %v1229
    %v1269 = vunpack.c.l.b16 %v1230
    %v1270 = vunpack.c.l.b16 %v1231
    %v1271 = vunpack.c.l.b16 %v1232
    %v1272 = vunpack.c.l.b16 %v1233
    %v1273 = vunpack.c.l.b16 %v1234
    %v1274 = vunpack.c.l.b16 %v1235
    %v1275 = vunpack.c.l.b16 %v1236
    %v1276 = vunpack.c.l.b16 %v1237
    %v1277 = vunpack.c.l.b16 %v1238
    %v1278 = vunpack.c.l.b16 %v1239
    %v1279 = vunpack.c.l.b16 %v1240
    %v1280 = vunpack.c.l.b16 %v1241
    %v1281 = vunpack.c.l.b16 %v1242
    %v1282 = vpack.c.b16 %v1267, %v1266
    %v1283 = vpack.c.b16 %v1269, %v1268
    %v1284 = vpack.c.b16 %v1271, %v1270
    %v1285 = vpack.c.b16 %v1273, %v1272
    %v1286 = vpack.c.b16 %v1275, %v1274
    %v1287 = vpack.c.b16 %v1277, %v1276
    %v1288 = vpack.c.b16 %v1279, %v1278
    %v1289 = vpack.c.b16 %v1281, %v1280
    %1298 = vmatprep.subr.bf16.mxu0 0
    %1299 = vmatpush1.bf16.msra.mxu0 %v1282
    %1300 = vmatprep.subr.bf16.mxu0 0
    %1301 = vmatpush1.bf16.msra.mxu0 %v1283
    %1302 = vmatprep.subr.bf16.mxu0 0
    %1303 = vmatpush1.bf16.msra.mxu0 %v1284
    %1304 = vmatprep.subr.bf16.mxu0 0
    %1305 = vmatpush1.bf16.msra.mxu0 %v1285
    %1306 = vmatprep.subr.bf16.mxu0 0
    %1307 = vmatpush1.bf16.msra.mxu0 %v1286
    %1308 = vmatprep.subr.bf16.mxu0 0
    %1309 = vmatpush1.bf16.msra.mxu0 %v1287
    %1310 = vmatprep.subr.bf16.mxu0 0
    %1311 = vmatpush1.bf16.msra.mxu0 %v1288
    %1312 = vmatprep.subr.bf16.mxu0 0
    %1313 = vmatpush1.bf16.msra.mxu0 %v1289
    %1314 = vmatprep.subr.bf16.mxu0 0
    %1315 = vmatpush1.bf16.msra.mxu0 0
    %1316 = vmatprep.subr.bf16.mxu0 0
    %1317 = vmatpush1.bf16.msra.mxu0 0
    %1318 = vmatprep.subr.bf16.mxu0 0
    %1319 = vmatpush1.bf16.msra.mxu0 0
    %1320 = vmatprep.subr.bf16.mxu0 0
    %1321 = vmatpush1.bf16.msra.mxu0 0
    %1322 = vmatprep.subr.bf16.mxu0 0
    %1323 = vmatpush1.bf16.msra.mxu0 0
    %1324 = vmatprep.subr.bf16.mxu0 0
    %1325 = vmatpush1.bf16.msra.mxu0 0
    %1326 = vmatprep.subr.bf16.mxu0 0
    %1327 = vmatpush1.bf16.msra.mxu0 0
    %1328 = vmatprep.subr.bf16.mxu0 0
    %1329 = vmatpush1.bf16.msra.mxu0 0
    %1330 = vmatprep.mubr.bf16.mxu0 0
    %1331 = vmatmul.mubr.bf16.gmra.mrb[0].mxu0 %v1226
    %v1332 = vpop.f32.mrb[0].mxu0
    %v1333 = vadd.f32 %v1248, %v1332
    %v1334 = vpop.f32.mrb[0].mxu0
    %v1335 = vpop.f32.mrb[0].mxu0
    %v1336 = vadd.f32 %v1248, %v1335
    %v1337 = vpop.f32.mrb[0].mxu0
    %1338 = vdwg.mxu0
    %v1339 = vmax.f32 %v1333, 0.0
    %v1340 = vmax.f32 %v1336, 0.0
    %v1341 = vpack.c.bf16 %v1340, %v1339
    %v1342 = vld [vmem:[%s11] sm:$0xf]
    %1343 = vmatprep.subr.bf16.mxu0 0
    %1344 = vmatpush1.bf16.xpose.msra.mxu0 %v1341
    %1345 = vmatprep.subr.bf16.mxu0 0
    %1346 = vmatpush1.bf16.xpose.msra.mxu0 0
    %1347 = vmatprep.subr.bf16.mxu0 0
    %1348 = vmatpush1.bf16.xpose.msra.mxu0 0
    %1349 = vmatprep.subr.bf16.mxu0 0
    %1350 = vmatpush1.bf16.xpose.msra.mxu0 0
    %1351 = vmatprep.subr.bf16.mxu0 0
    %1352 = vmatpush1.bf16.xpose.msra.mxu0 0
    %1353 = vmatprep.subr.bf16.mxu0 0
    %1354 = vmatpush1.bf16.xpose.msra.mxu0 0
    %1355 = vmatprep.subr.bf16.mxu0 0
    %1356 = vmatpush1.bf16.xpose.msra.mxu0 0
    %1357 = vmatprep.subr.bf16.mxu0 0
    %1358 = vmatpush1.bf16.xpose.msra.mxu0 0
    %1359 = vmatprep.subr.bf16.mxu0 0
    %1360 = vmatpush1.bf16.xpose.msra.mxu0 0
    %1361 = vmatprep.subr.bf16.mxu0 0
    %1362 = vmatpush1.bf16.xpose.msra.mxu0 0
    %1363 = vmatprep.subr.bf16.mxu0 0
    %1364 = vmatpush1.bf16.xpose.msra.mxu0 0
    %1365 = vmatprep.subr.bf16.mxu0 0
    %1366 = vmatpush1.bf16.xpose.msra.mxu0 0
    %1367 = vmatprep.subr.bf16.mxu0 0
    %1368 = vmatpush1.bf16.xpose.msra.mxu0 0
    %1369 = vmatprep.subr.bf16.mxu0 0
    %1370 = vmatpush1.bf16.xpose.msra.mxu0 0
    %1371 = vmatprep.subr.bf16.mxu0 0
    %1372 = vmatpush1.bf16.xpose.msra.mxu0 0
    %1373 = vmatprep.subr.bf16.mxu0 0
    %1374 = vmatpush1.bf16.xpose.msra.mxu0 0
    %1375 = vmatprep.mubr.bf16.mxu0 0
    %1376 = vmatmul.mubr.bf16.gmra.mrb[0].mxu0 %v1342
    %v1377 = vpop.f32.mrb[0].mxu0
    %v1378 = vadd.f32 0.0, %v1377
    %v1379 = vpop.f32.mrb[0].mxu0
    %v1380 = vpop.f32.mrb[0].mxu0
    %v1381 = vpop.f32.mrb[0].mxu0
    %1382 = vdwg.mxu0
    %v1383 = vld [vmem:[#allocation2] sm:$0x1]
    %1385 = vset.pattern.permute.xlu0 0
    %1386 = vperm.xlu0 %1385, %v1383
    %v1387 = vpop.permute.xlu0 %1386
    %v1389 = vlaneseq
    %v1390 = vshrl.u32 %v1389, 7
    %v1391 = vsub.s32 0, %v1390
    %v1392 = vrot.slane %v1387, %v1391
    %v1393 = vadd.f32 %v1378, %v1392
    %v1394 = vxor.u32 %v1393, 2147483648
    %v1395 = vmul.f32 %v1394, 1.442695
    %v1396 = vpow.pop %v1395
    %v1397 = vadd.f32 %v1396, 1.0
    %v1398 = vrcp.pop %v1397
    %v1399 = vmul.f32 1.0, %v1398
    %vm1400 = vcmask 122880
    %1401 = vst.msk [vmem:[#allocation14] sm:$0x1] %vm1400, %v1399
    // Predicated region
    $region78: #{tpu_custom_call.1} parent=1 // pred_check
      _
    $region79: #{tpu_custom_call.1} parent=1 // pred_check_branch
      %1403 = sbr.rel (0) target = $region81
    $region80: #{tpu_custom_call.1} parent=1 // pred_region
      %s1405 = ssub.s32 16, 16
      %1406 = vsyncadd [#allocation5], %s1405
      %s1408 = sshll.u32 [#allocation14], 4
      %s1409 = int_to_ptr.vmem [resolvable:$true] %s1408
      %1411 = dma.vmem_to_hbm [thread:$0]  %s1409, 16, %s13, [#allocation5]
    $region81: #{tpu_custom_call.1} parent=1 // pred_fallthru
      _
    // Predicated region
    $region82: #{tpu_custom_call.1} parent=1 // pred_check
      _
    $region83: #{tpu_custom_call.1} parent=1 // pred_check_branch
      %1413 = sbr.rel (0) target = $region85
    $region84: #{tpu_custom_call.1} parent=1 // pred_region
      %1414 = dma.done [#allocation5], 16
    $region85: #{tpu_custom_call.1} parent=1 // pred_fallthru
      _
    %1415 = vsyncpa [#allocation4], 1
    %1416 = vsyncpa [#allocation7], 1
    %1417 = vsyncpa [#allocation10], 1
    %1418 = vsyncpa [#allocation13], 1
    %1419 = vsyncpa [#allocation5], 1

</llo_original>
